<compile_context>
chip_gen: v7x
topology: tpu7x:2x2x1
jax: 0.10.0
libtpu: 0.0.40
codegen_flags: <defaults>
</compile_context>

<pallas_src>
import functools

import jax
import jax.numpy as jnp
from jax.experimental import pallas as pl
from jax.experimental.pallas import tpu as pltpu

_BN_EPS = 1e-5


def _round_up(x, m):
    return (x + m - 1) // m * m


def _pad_axis(a, axis, size):
    pad = size - a.shape[axis]
    if pad <= 0:
        return a
    widths = [(0, 0)] * a.ndim
    widths[axis] = (0, pad)
    return jnp.pad(a, widths)


# ----------------------------------------------------------------------------
# Fused kernel.  One grid step == one (image, output-row band) pair.
#   stage 1: (band_rows*W_sp, Cin_p) @ (Cin_p, P) ; ReLU6  -> bf16 VMEM scratch
#            (bias + zero halo come from the augmented ones channel)   (MXU)
#   stage 2: 3x3 depthwise over the band scratch + bias + ReLU6        (VPU)
#   stage 3: (BH*W_out, P) @ (P, Cout_pad) + bias -> o_ref             (MXU)
# ----------------------------------------------------------------------------
def _fused_bottleneck_kernel(x_ref, w1_ref, w2_ref, b2_ref, w3_ref, b3_ref,
                             o_ref, mid_ref, *,
                             BH, W_out, W_sp, rows_needed, stride, dilation):
    d = dilation
    P = w1_ref.shape[1]
    band = pl.program_id(1)
    row0 = band * (BH * stride)          # first padded-canvas row of this band

    # ---- Stage 1: 1x1 expansion conv (+folded BN, bias via ones-channel) ----
    # W_sp % 8 == 0, so the flattened start offset is sublane aligned.
    start = pl.multiple_of(row0 * W_sp, 8)
    xb = x_ref[0, pl.ds(start, rows_needed * W_sp), :]          # (rows*W_sp, Cin_p)
    t = jnp.dot(xb, w1_ref[...], preferred_element_type=jnp.float32)
    t = jnp.clip(t, 0.0, 6.0)                                   # ReLU6
    # Padding-ring positions have an all-zero augmented input row -> t == 0
    # there, which is exactly the depthwise conv's zero padding.
    mid_ref[...] = t.reshape(rows_needed, W_sp, P).astype(mid_ref.dtype)

    # ---- Stage 2: 3x3 depthwise conv (+folded BN) + ReLU6 (VPU, f32 acc) ----
    acc = jnp.zeros((BH, W_out, P), jnp.float32)
    for dy in range(3):
        if stride == 1:
            # One row-slab load per dy, reused across the three dx taps.
            rows = mid_ref[dy * d:dy * d + BH, :, :]            # (BH, W_sp, P)
            for dx in range(3):
                tap = rows[:, dx * d:dx * d + W_out, :]         # (BH, W_out, P)
                acc = acc + tap.astype(jnp.float32) * w2_ref[dy * 3 + dx, :]
        else:
            # TODO(synk): strided (sublane) tap reads are untested; the demo
            # and typical use here is stride=1.
            for dx in range(3):
                tap = mid_ref[pl.ds(dy * d, BH, stride=stride),
                              pl.ds(dx * d, W_out, stride=stride), :]
                acc = acc + tap.astype(jnp.float32) * w2_ref[dy * 3 + dx, :]
    y = jnp.clip(acc + b2_ref[...], 0.0, 6.0)

    # ---- Stage 3: 1x1 projection conv (+folded BN), no ReLU (MXU) ----
    y2 = y.reshape(BH * W_out, P).astype(w3_ref.dtype)
    z = jnp.dot(y2, w3_ref[...], preferred_element_type=jnp.float32)
    z = z + b3_ref[...]
    o_ref[0] = z.astype(o_ref.dtype)


# ----------------------------------------------------------------------------
# Parameter construction (deterministic, synthetic; BN folded to scale/bias).
# ----------------------------------------------------------------------------
def make_params(key, inplanes, outplanes, expansion=6):
    planes = inplanes * expansion
    ks = jax.random.split(key, 15)

    def fold_bn(kg, kb, km, kv, c):
        gamma = jax.random.uniform(kg, (c,), jnp.float32, 0.5, 1.5)
        beta = 0.1 * jax.random.normal(kb, (c,), jnp.float32)
        mean = 0.1 * jax.random.normal(km, (c,), jnp.float32)
        var = jax.random.uniform(kv, (c,), jnp.float32, 0.5, 1.5)
        scale = gamma / jnp.sqrt(var + _BN_EPS)
        bias = beta - mean * scale
        return scale, bias

    params = {
        # conv1: 1x1, inplanes -> planes, no bias (as (Cin, Cout) matmul weight)
        "w1": 0.1 * jax.random.normal(ks[0], (inplanes, planes), jnp.float32),
        # conv2: 3x3 depthwise, per-channel weights laid out as (kh*kw, C)
        "w2": 0.1 * jax.random.normal(ks[1], (9, planes), jnp.float32),
        # conv3: 1x1, planes -> outplanes, no bias
        "w3": 0.1 * jax.random.normal(ks[2], (planes, outplanes), jnp.float32),
    }
    params["s1"], params["b1"] = fold_bn(ks[3], ks[4], ks[5], ks[6], planes)
    params["s2"], params["b2"] = fold_bn(ks[7], ks[8], ks[9], ks[10], planes)
    params["s3"], params["b3"] = fold_bn(ks[11], ks[12], ks[13], ks[14], outplanes)
    return params


# ----------------------------------------------------------------------------
# Full LinearBottleNeck forward.  Input/output are NCHW like the PyTorch module
# (single boundary transpose each way; internally everything is NHWC).
# ----------------------------------------------------------------------------
def linear_bottleneck(x_nchw, params, *, inplanes, outplanes, expansion=6,
                      stride=1, dilation=1, matmul_dtype=jnp.bfloat16,
                      band_rows=8):
    N, Cin, H, W = x_nchw.shape
    planes = inplanes * expansion
    d = dilation
    H_out = (H - 1) // stride + 1
    W_out = (W - 1) // stride + 1
    P_pad = _round_up(planes, 128)
    Cout_pad = _round_up(outplanes, 128)

    # Output-row band height: largest divisor of H_out not exceeding band_rows.
    BH = 1
    for cand in range(1, min(H_out, band_rows) + 1):
        if H_out % cand == 0:
            BH = cand
    num_bands = H_out // BH
    rows_needed = (BH - 1) * stride + 2 * d + 1        # band rows incl. halo

    # Zero-padded spatial canvas for the depthwise conv's padding=d.  The
    # spatial width is rounded to a multiple of 8 so the stage-1 scratch store
    # and the flattened dynamic row loads stay sublane aligned.
    H_need = (H_out - 1) * stride + 2 * d + 1
    W_need = (W_out - 1) * stride + 2 * d + 1
    H_sp = max(H_need, H + d)
    W_sp = _round_up(max(W_need, W + d), 8)
    pad_top, pad_left = d, d
    pad_bot = H_sp - H - d
    pad_right = W_sp - W - d

    # NCHW -> NHWC once; append an all-ones channel (carries the folded bn1
    # bias through the stage-1 matmul AND yields exact zeros in the padding
    # ring), then pad channels to a multiple of 8.
    x_nhwc = jnp.transpose(x_nchw, (0, 2, 3, 1))
    Cin_aug = Cin + 1
    Cin_p = _round_up(Cin_aug, 8)
    x_aug = jnp.concatenate([x_nhwc, jnp.ones((N, H, W, 1), x_nhwc.dtype)], axis=-1)
    x_aug = jnp.pad(x_aug, ((0, 0), (pad_top, pad_bot), (pad_left, pad_right),
                            (0, Cin_p - Cin_aug)))
    x2 = x_aug.reshape(N, H_sp * W_sp, Cin_p).astype(matmul_dtype)

    # Fold BN scales into the conv weights; pad channel dims to 128 multiples
    # (padded lanes are zero and cannot affect real outputs).  MXU operands
    # are pre-cast to matmul_dtype (bf16 by default) in the wrapper.
    w1s = params["w1"] * params["s1"][None, :]                       # (Cin, planes)
    w1_aug = jnp.concatenate([w1s, params["b1"][None, :]], axis=0)   # + bias row
    w1_aug = _pad_axis(_pad_axis(w1_aug, 0, Cin_p), 1, P_pad).astype(matmul_dtype)
    w2s = _pad_axis(params["w2"] * params["s2"][None, :], 1, P_pad)  # f32 (VPU)
    b2 = _pad_axis(params["b2"], 0, P_pad).reshape(1, P_pad)
    w3s = _pad_axis(_pad_axis(params["w3"] * params["s3"][None, :], 0, P_pad),
                    1, Cout_pad).astype(matmul_dtype)
    b3 = _pad_axis(params["b3"], 0, Cout_pad).reshape(1, Cout_pad)

    kernel = functools.partial(
        _fused_bottleneck_kernel,
        BH=BH, W_out=W_out, W_sp=W_sp, rows_needed=rows_needed,
        stride=stride, dilation=dilation)

    out2d = pl.pallas_call(
        kernel,
        out_shape=jax.ShapeDtypeStruct((N, H_out * W_out, Cout_pad), x_nchw.dtype),
        grid=(N, num_bands),
        in_specs=[
            # Whole padded image stays VMEM-resident while its bands are
            # processed (index is constant in the band axis -> no re-DMA).
            pl.BlockSpec((1, H_sp * W_sp, Cin_p), lambda n, b: (n, 0, 0)),
            pl.BlockSpec((Cin_p, P_pad), lambda n, b: (0, 0)),
            pl.BlockSpec((9, P_pad), lambda n, b: (0, 0)),
            pl.BlockSpec((1, P_pad), lambda n, b: (0, 0)),
            pl.BlockSpec((P_pad, Cout_pad), lambda n, b: (0, 0)),
            pl.BlockSpec((1, Cout_pad), lambda n, b: (0, 0)),
        ],
        out_specs=pl.BlockSpec((1, BH * W_out, Cout_pad), lambda n, b: (n, b, 0)),
        # bf16 band scratch: expanded intermediate for one band + halo only.
        scratch_shapes=[pltpu.VMEM((rows_needed, W_sp, P_pad), matmul_dtype)],
        compiler_params=pltpu.CompilerParams(
            dimension_semantics=("parallel", "parallel"),
            vmem_limit_bytes=64 * 1024 * 1024),
    )(x2, w1_aug, w2s, b2, w3s, b3)

    # Strip channel padding (fuses with the exit transpose in XLA).
    out = out2d[..., :outplanes].reshape(N, H_out, W_out, outplanes)

    # Original PyTorch condition is `stride == 1 & self.inplanes == self.planes`,
    # i.e. the chained comparison `stride == (1 & inplanes) == planes`; with
    # expansion=6 it is never true, so the residual add is dead code.
    # TODO(synk): original module's residual branch is buggy/unreachable.
    if stride == (1 & inplanes) == planes:
        out = out + x_nhwc

    return jnp.transpose(out, (0, 3, 1, 2))  # NHWC -> NCHW


if __name__ == "__main__":
    N, Cin, H, W = 2, 4, 16, 16
    Cout, expansion, stride, dilation = 8, 6, 1, 1

    key = jax.random.PRNGKey(0)
    kx, kp = jax.random.split(key)
    x = jax.random.normal(kx, (N, Cin, H, W), jnp.float32)
    params = make_params(kp, Cin, Cout, expansion)

    fwd = jax.jit(functools.partial(
        linear_bottleneck, inplanes=Cin, outplanes=Cout, expansion=expansion,
        stride=stride, dilation=dilation))
    out = fwd(x, params)
    jax.block_until_ready(out)

    H_out = (H - 1) // stride + 1
    W_out = (W - 1) // stride + 1
    assert out.shape == (N, Cout, H_out, W_out), out.shape
    assert bool(jnp.all(jnp.isfinite(out)))
    assert bool(jnp.any(jnp.abs(out) > 0))
    print("KERNEL_OK")
</pallas_src>

<mosaic_0001>
module attributes {stable_mosaic.version = 11 : i64} {
  func.func @_fused_bottleneck_kernel(%arg0: i32, %arg1: i32, %arg2: memref<1x432x8xbf16, #tpu.memory_space<vmem>>, %arg3: memref<8x128xbf16, #tpu.memory_space<vmem>>, %arg4: memref<9x128xf32, #tpu.memory_space<vmem>>, %arg5: memref<1x128xf32, #tpu.memory_space<vmem>>, %arg6: memref<128x128xbf16, #tpu.memory_space<vmem>>, %arg7: memref<1x128xf32, #tpu.memory_space<vmem>>, %arg8: memref<1x128x128xf32, #tpu.memory_space<vmem>>, %arg9: memref<10x24x128xbf16, #tpu.memory_space<vmem>>) attributes {dimension_semantics = [#tpu.dimension_semantics<parallel>, #tpu.dimension_semantics<parallel>], iteration_bounds = array<i64: 2, 2>, scalar_prefetch = 0 : i64, scratch_operands = 1 : i64, tpu.core_type = #tpu.core_type<tc>, window_params = [{transform_indices = @transform_0, window_bounds = array<i64: 1, 432, 8>}, {pipeline_mode = #tpu.pipeline_mode<synchronous>, transform_indices = @transform_1, window_bounds = array<i64: 8, 128>}, {pipeline_mode = #tpu.pipeline_mode<synchronous>, transform_indices = @transform_2, window_bounds = array<i64: 9, 128>}, {pipeline_mode = #tpu.pipeline_mode<synchronous>, transform_indices = @transform_3, window_bounds = array<i64: 1, 128>}, {pipeline_mode = #tpu.pipeline_mode<synchronous>, transform_indices = @transform_4, window_bounds = array<i64: 128, 128>}, {pipeline_mode = #tpu.pipeline_mode<synchronous>, transform_indices = @transform_5, window_bounds = array<i64: 1, 128>}, {transform_indices = @transform_6, window_bounds = array<i64: 1, 128, 128>}]} {
    %c8_i32 = arith.constant 8 : i32
    %0 = arith.muli %arg1, %c8_i32 : i32
    %c24_i32 = arith.constant 24 : i32
    %1 = arith.muli %0, %c24_i32 : i32
    %2 = tpu.assume_multiple %1, 8 : i32
    %c0 = arith.constant 0 : index
    %3 = arith.index_cast %2 : i32 to index
    %c0_0 = arith.constant 0 : index
    %4 = vector.load %arg2[%c0, %3, %c0_0] : memref<1x432x8xbf16, #tpu.memory_space<vmem>>, vector<1x240x8xbf16>
    %5 = vector.shape_cast %4 : vector<1x240x8xbf16> to vector<240x8xbf16>
    %c0_1 = arith.constant 0 : index
    %c0_2 = arith.constant 0 : index
    %6 = vector.load %arg3[%c0_1, %c0_2] : memref<8x128xbf16, #tpu.memory_space<vmem>>, vector<8x128xbf16>
    %cst = arith.constant dense<0.000000e+00> : vector<240x128xf32>
    %7 = tpu.matmul %5, %6, %cst {dimension_numbers = #tpu.dot_dimension_numbers<[1], [0], [0], [1], [0, 0, 1, 1], [], []>} : vector<240x8xbf16>, vector<8x128xbf16>, vector<240x128xf32> -> vector<240x128xf32>
    %cst_3 = arith.constant 0.000000e+00 : f32
    %cst_4 = arith.constant 6.000000e+00 : f32
    %8 = vector.broadcast %cst_3 : f32 to vector<240x128xf32>
    %9 = arith.maximumf %8, %7 : vector<240x128xf32>
    %10 = vector.broadcast %cst_4 : f32 to vector<240x128xf32>
    %11 = arith.minimumf %10, %9 : vector<240x128xf32>
    %12 = vector.shape_cast %11 : vector<240x128xf32> to vector<10x24x128xf32>
    %13 = arith.truncf %12 : vector<10x24x128xf32> to vector<10x24x128xbf16>
    %c0_5 = arith.constant 0 : index
    %c0_6 = arith.constant 0 : index
    %c0_7 = arith.constant 0 : index
    %14 = vector.load %arg9[%c0_5, %c0_6, %c0_7] : memref<10x24x128xbf16, #tpu.memory_space<vmem>>, vector<10x24x128xbf16>
    tpu.vector_store %arg9[%c0_5, %c0_6, %c0_7], %13 {strides = array<i32>} : memref<10x24x128xbf16, #tpu.memory_space<vmem>>, vector<10x24x128xbf16>,
    %cst_8 = arith.constant 0.000000e+00 : f32
    %15 = vector.broadcast %cst_8 : f32 to vector<8x16x128xf32>
    %c0_9 = arith.constant 0 : index
    %c0_10 = arith.constant 0 : index
    %c0_11 = arith.constant 0 : index
    %16 = vector.load %arg9[%c0_9, %c0_10, %c0_11] : memref<10x24x128xbf16, #tpu.memory_space<vmem>>, vector<8x24x128xbf16>
    %17 = vector.extract_strided_slice %16 {offsets = [0, 0, 0], sizes = [8, 16, 128], strides = [1, 1, 1]} : vector<8x24x128xbf16> to vector<8x16x128xbf16>
    %18 = arith.extf %17 : vector<8x16x128xbf16> to vector<8x16x128xf32>
    %c0_12 = arith.constant 0 : index
    %c0_13 = arith.constant 0 : index
    %19 = vector.load %arg4[%c0_12, %c0_13] : memref<9x128xf32, #tpu.memory_space<vmem>>, vector<1x128xf32>
    %20 = vector.shape_cast %19 : vector<1x128xf32> to vector<128xf32>
    %21 = vector.shape_cast %20 : vector<128xf32> to vector<1x1x128xf32>
    %22 = vector.broadcast %21 : vector<1x1x128xf32> to vector<8x16x128xf32>
    %23 = arith.mulf %18, %22 : vector<8x16x128xf32>
    %24 = arith.addf %15, %23 : vector<8x16x128xf32>
    %25 = vector.extract_strided_slice %16 {offsets = [0, 1, 0], sizes = [8, 16, 128], strides = [1, 1, 1]} : vector<8x24x128xbf16> to vector<8x16x128xbf16>
    %26 = arith.extf %25 : vector<8x16x128xbf16> to vector<8x16x128xf32>
    %c1 = arith.constant 1 : index
    %c0_14 = arith.constant 0 : index
    %27 = vector.load %arg4[%c1, %c0_14] : memref<9x128xf32, #tpu.memory_space<vmem>>, vector<1x128xf32>
    %28 = vector.shape_cast %27 : vector<1x128xf32> to vector<128xf32>
    %29 = vector.shape_cast %28 : vector<128xf32> to vector<1x1x128xf32>
    %30 = vector.broadcast %29 : vector<1x1x128xf32> to vector<8x16x128xf32>
    %31 = arith.mulf %26, %30 : vector<8x16x128xf32>
    %32 = arith.addf %24, %31 : vector<8x16x128xf32>
    %33 = vector.extract_strided_slice %16 {offsets = [0, 2, 0], sizes = [8, 16, 128], strides = [1, 1, 1]} : vector<8x24x128xbf16> to vector<8x16x128xbf16>
    %34 = arith.extf %33 : vector<8x16x128xbf16> to vector<8x16x128xf32>
    %c2 = arith.constant 2 : index
    %c0_15 = arith.constant 0 : index
    %35 = vector.load %arg4[%c2, %c0_15] : memref<9x128xf32, #tpu.memory_space<vmem>>, vector<1x128xf32>
    %36 = vector.shape_cast %35 : vector<1x128xf32> to vector<128xf32>
    %37 = vector.shape_cast %36 : vector<128xf32> to vector<1x1x128xf32>
    %38 = vector.broadcast %37 : vector<1x1x128xf32> to vector<8x16x128xf32>
    %39 = arith.mulf %34, %38 : vector<8x16x128xf32>
    %40 = arith.addf %32, %39 : vector<8x16x128xf32>
    %c1_16 = arith.constant 1 : index
    %c0_17 = arith.constant 0 : index
    %c0_18 = arith.constant 0 : index
    %41 = vector.load %arg9[%c1_16, %c0_17, %c0_18] : memref<10x24x128xbf16, #tpu.memory_space<vmem>>, vector<8x24x128xbf16>
    %42 = vector.extract_strided_slice %41 {offsets = [0, 0, 0], sizes = [8, 16, 128], strides = [1, 1, 1]} : vector<8x24x128xbf16> to vector<8x16x128xbf16>
    %43 = arith.extf %42 : vector<8x16x128xbf16> to vector<8x16x128xf32>
    %c3 = arith.constant 3 : index
    %c0_19 = arith.constant 0 : index
    %44 = vector.load %arg4[%c3, %c0_19] : memref<9x128xf32, #tpu.memory_space<vmem>>, vector<1x128xf32>
    %45 = vector.shape_cast %44 : vector<1x128xf32> to vector<128xf32>
    %46 = vector.shape_cast %45 : vector<128xf32> to vector<1x1x128xf32>
    %47 = vector.broadcast %46 : vector<1x1x128xf32> to vector<8x16x128xf32>
    %48 = arith.mulf %43, %47 : vector<8x16x128xf32>
    %49 = arith.addf %40, %48 : vector<8x16x128xf32>
    %50 = vector.extract_strided_slice %41 {offsets = [0, 1, 0], sizes = [8, 16, 128], strides = [1, 1, 1]} : vector<8x24x128xbf16> to vector<8x16x128xbf16>
    %51 = arith.extf %50 : vector<8x16x128xbf16> to vector<8x16x128xf32>
    %c4 = arith.constant 4 : index
    %c0_20 = arith.constant 0 : index
    %52 = vector.load %arg4[%c4, %c0_20] : memref<9x128xf32, #tpu.memory_space<vmem>>, vector<1x128xf32>
    %53 = vector.shape_cast %52 : vector<1x128xf32> to vector<128xf32>
    %54 = vector.shape_cast %53 : vector<128xf32> to vector<1x1x128xf32>
    %55 = vector.broadcast %54 : vector<1x1x128xf32> to vector<8x16x128xf32>
    %56 = arith.mulf %51, %55 : vector<8x16x128xf32>
    %57 = arith.addf %49, %56 : vector<8x16x128xf32>
    %58 = vector.extract_strided_slice %41 {offsets = [0, 2, 0], sizes = [8, 16, 128], strides = [1, 1, 1]} : vector<8x24x128xbf16> to vector<8x16x128xbf16>
    %59 = arith.extf %58 : vector<8x16x128xbf16> to vector<8x16x128xf32>
    %c5 = arith.constant 5 : index
    %c0_21 = arith.constant 0 : index
    %60 = vector.load %arg4[%c5, %c0_21] : memref<9x128xf32, #tpu.memory_space<vmem>>, vector<1x128xf32>
    %61 = vector.shape_cast %60 : vector<1x128xf32> to vector<128xf32>
    %62 = vector.shape_cast %61 : vector<128xf32> to vector<1x1x128xf32>
    %63 = vector.broadcast %62 : vector<1x1x128xf32> to vector<8x16x128xf32>
    %64 = arith.mulf %59, %63 : vector<8x16x128xf32>
    %65 = arith.addf %57, %64 : vector<8x16x128xf32>
    %c2_22 = arith.constant 2 : index
    %c0_23 = arith.constant 0 : index
    %c0_24 = arith.constant 0 : index
    %66 = vector.load %arg9[%c2_22, %c0_23, %c0_24] : memref<10x24x128xbf16, #tpu.memory_space<vmem>>, vector<8x24x128xbf16>
    %67 = vector.extract_strided_slice %66 {offsets = [0, 0, 0], sizes = [8, 16, 128], strides = [1, 1, 1]} : vector<8x24x128xbf16> to vector<8x16x128xbf16>
    %68 = arith.extf %67 : vector<8x16x128xbf16> to vector<8x16x128xf32>
    %c6 = arith.constant 6 : index
    %c0_25 = arith.constant 0 : index
    %69 = vector.load %arg4[%c6, %c0_25] : memref<9x128xf32, #tpu.memory_space<vmem>>, vector<1x128xf32>
    %70 = vector.shape_cast %69 : vector<1x128xf32> to vector<128xf32>
    %71 = vector.shape_cast %70 : vector<128xf32> to vector<1x1x128xf32>
    %72 = vector.broadcast %71 : vector<1x1x128xf32> to vector<8x16x128xf32>
    %73 = arith.mulf %68, %72 : vector<8x16x128xf32>
    %74 = arith.addf %65, %73 : vector<8x16x128xf32>
    %75 = vector.extract_strided_slice %66 {offsets = [0, 1, 0], sizes = [8, 16, 128], strides = [1, 1, 1]} : vector<8x24x128xbf16> to vector<8x16x128xbf16>
    %76 = arith.extf %75 : vector<8x16x128xbf16> to vector<8x16x128xf32>
    %c7 = arith.constant 7 : index
    %c0_26 = arith.constant 0 : index
    %77 = vector.load %arg4[%c7, %c0_26] : memref<9x128xf32, #tpu.memory_space<vmem>>, vector<1x128xf32>
    %78 = vector.shape_cast %77 : vector<1x128xf32> to vector<128xf32>
    %79 = vector.shape_cast %78 : vector<128xf32> to vector<1x1x128xf32>
    %80 = vector.broadcast %79 : vector<1x1x128xf32> to vector<8x16x128xf32>
    %81 = arith.mulf %76, %80 : vector<8x16x128xf32>
    %82 = arith.addf %74, %81 : vector<8x16x128xf32>
    %83 = vector.extract_strided_slice %66 {offsets = [0, 2, 0], sizes = [8, 16, 128], strides = [1, 1, 1]} : vector<8x24x128xbf16> to vector<8x16x128xbf16>
    %84 = arith.extf %83 : vector<8x16x128xbf16> to vector<8x16x128xf32>
    %c8 = arith.constant 8 : index
    %c0_27 = arith.constant 0 : index
    %85 = vector.load %arg4[%c8, %c0_27] : memref<9x128xf32, #tpu.memory_space<vmem>>, vector<1x128xf32>
    %86 = vector.shape_cast %85 : vector<1x128xf32> to vector<128xf32>
    %87 = vector.shape_cast %86 : vector<128xf32> to vector<1x1x128xf32>
    %88 = vector.broadcast %87 : vector<1x1x128xf32> to vector<8x16x128xf32>
    %89 = arith.mulf %84, %88 : vector<8x16x128xf32>
    %90 = arith.addf %82, %89 : vector<8x16x128xf32>
    %c0_28 = arith.constant 0 : index
    %c0_29 = arith.constant 0 : index
    %91 = vector.load %arg5[%c0_28, %c0_29] : memref<1x128xf32, #tpu.memory_space<vmem>>, vector<1x128xf32>
    %92 = vector.shape_cast %91 : vector<1x128xf32> to vector<1x1x128xf32>
    %93 = vector.broadcast %92 : vector<1x1x128xf32> to vector<8x16x128xf32>
    %94 = arith.addf %90, %93 : vector<8x16x128xf32>
    %cst_30 = arith.constant 0.000000e+00 : f32
    %cst_31 = arith.constant 6.000000e+00 : f32
    %95 = vector.broadcast %cst_30 : f32 to vector<8x16x128xf32>
    %96 = arith.maximumf %95, %94 : vector<8x16x128xf32>
    %97 = vector.broadcast %cst_31 : f32 to vector<8x16x128xf32>
    %98 = arith.minimumf %97, %96 : vector<8x16x128xf32>
    %99 = vector.shape_cast %98 : vector<8x16x128xf32> to vector<128x128xf32>
    %100 = arith.truncf %99 : vector<128x128xf32> to vector<128x128xbf16>
    %c0_32 = arith.constant 0 : index
    %c0_33 = arith.constant 0 : index
    %101 = vector.load %arg6[%c0_32, %c0_33] : memref<128x128xbf16, #tpu.memory_space<vmem>>, vector<128x128xbf16>
    %cst_34 = arith.constant dense<0.000000e+00> : vector<128x128xf32>
    %102 = tpu.matmul %100, %101, %cst_34 {dimension_numbers = #tpu.dot_dimension_numbers<[1], [0], [0], [1], [0, 0, 1, 1], [], []>} : vector<128x128xbf16>, vector<128x128xbf16>, vector<128x128xf32> -> vector<128x128xf32>
    %c0_35 = arith.constant 0 : index
    %c0_36 = arith.constant 0 : index
    %103 = vector.load %arg7[%c0_35, %c0_36] : memref<1x128xf32, #tpu.memory_space<vmem>>, vector<1x128xf32>
    %104 = vector.broadcast %103 : vector<1x128xf32> to vector<128x128xf32>
    %105 = arith.addf %102, %104 : vector<128x128xf32>
    %c0_37 = arith.constant 0 : index
    %c0_38 = arith.constant 0 : index
    %c0_39 = arith.constant 0 : index
    %106 = vector.load %arg8[%c0_37, %c0_38, %c0_39] : memref<1x128x128xf32, #tpu.memory_space<vmem>>, vector<1x128x128xf32>
    %107 = vector.shape_cast %106 : vector<1x128x128xf32> to vector<128x128xf32>
    %108 = vector.shape_cast %105 : vector<128x128xf32> to vector<1x128x128xf32>
    tpu.vector_store %arg8[%c0_37, %c0_38, %c0_39], %108 {strides = array<i32>} : memref<1x128x128xf32, #tpu.memory_space<vmem>>, vector<1x128x128xf32>,
    return
  }
  func.func @transform_0(%arg0: i32, %arg1: i32) -> (i32, i32, i32) {
    %c0_i32 = arith.constant 0 : i32
    %c0_i32_0 = arith.constant 0 : i32
    %c0_i32_1 = arith.constant 0 : i32
    return %arg0, %c0_i32, %c0_i32_0 : i32, i32, i32
  }
  func.func @transform_1(%arg0: i32, %arg1: i32) -> (i32, i32) {
    %c0_i32 = arith.constant 0 : i32
    %c0_i32_0 = arith.constant 0 : i32
    %c0_i32_1 = arith.constant 0 : i32
    return %c0_i32, %c0_i32_0 : i32, i32
  }
  func.func @transform_2(%arg0: i32, %arg1: i32) -> (i32, i32) {
    %c0_i32 = arith.constant 0 : i32
    %c0_i32_0 = arith.constant 0 : i32
    %c0_i32_1 = arith.constant 0 : i32
    return %c0_i32, %c0_i32_0 : i32, i32
  }
  func.func @transform_3(%arg0: i32, %arg1: i32) -> (i32, i32) {
    %c0_i32 = arith.constant 0 : i32
    %c0_i32_0 = arith.constant 0 : i32
    %c0_i32_1 = arith.constant 0 : i32
    return %c0_i32, %c0_i32_0 : i32, i32
  }
  func.func @transform_4(%arg0: i32, %arg1: i32) -> (i32, i32) {
    %c0_i32 = arith.constant 0 : i32
    %c0_i32_0 = arith.constant 0 : i32
    %c0_i32_1 = arith.constant 0 : i32
    return %c0_i32, %c0_i32_0 : i32, i32
  }
  func.func @transform_5(%arg0: i32, %arg1: i32) -> (i32, i32) {
    %c0_i32 = arith.constant 0 : i32
    %c0_i32_0 = arith.constant 0 : i32
    %c0_i32_1 = arith.constant 0 : i32
    return %c0_i32, %c0_i32_0 : i32, i32
  }
  func.func @transform_6(%arg0: i32, %arg1: i32) -> (i32, i32, i32) {
    %c0_i32 = arith.constant 0 : i32
    %c0_i32_0 = arith.constant 0 : i32
    return %arg0, %arg1, %c0_i32 : i32, i32, i32
  }
}

</mosaic_0001>

<llo_original>
// kernel: linear_bottleneck.1
$region0: #{linear_bottleneck.1}
  #allocation0 [shape = 'u32[]', space=smem, size = 0x4, offset = 0x4, fixed_abs, tag = 'smem constant byte address 0x4 - core index']
  #allocation1 [shape = 'u32[144,128]{1,0:T(1,128)}', space=vmem, size = 0x12000, scoped, tag = 'internal scratch']
  #allocation2 [shape = 'bf16[10,24,128]{2,1,0:T(8,128)(2,1)}', space=vmem, size = 0xf000, scoped, tag = 'scratch operand']
  %s0 = inlined_call_operand.hbm [shape: bf16[2,432,8], index: 0, kind: input, shape index: {}]
  %s1 = inlined_call_operand.hbm [shape: bf16[8,128], index: 1, kind: input, shape index: {}]
  %s2 = inlined_call_operand.hbm [shape: f32[9,128], index: 2, kind: input, shape index: {}]
  %s3 = inlined_call_operand.hbm [shape: f32[1,128], index: 3, kind: input, shape index: {}]
  %s4 = inlined_call_operand.hbm [shape: bf16[128,128], index: 4, kind: input, shape index: {}]
  %s5 = inlined_call_operand.hbm [shape: f32[1,128], index: 5, kind: input, shape index: {}]
  %s6 = inlined_call_operand.hbm [shape: f32[2,256,128], index: 6, kind: output, shape index: {}]
  %s7 = sld [smem:[#allocation0]]
  $region81: #{linear_bottleneck.1} parent=0
    _
  %s9 = ssub.s32 1, %s7
  %s10 = scalar_select 0, %s9, %s7
  $region1: #{linear_bottleneck.1} parent=0
    #allocation3 [shape = 'u8[221184]{0}', space=vmem, size = 0x36000, scoped, tag = 'input window, operand 0']
    #allocation4 [shape = 's32[2]{0}', space=sflag, size = 0x8, scoped, tag = 'scoped memory for linear_bottleneck.1']
    #allocation5 [shape = 's32[2]{0}', space=sflag, size = 0x8, scoped, tag = 'scoped memory for linear_bottleneck.1']
    #allocation6 [shape = 'u8[2048]{0}', space=vmem, size = 0x800, scoped, tag = 'input window, operand 1, single buffered']
    #allocation7 [shape = 's32[1]{0}', space=sflag, size = 0x4, scoped, tag = 'scoped memory for linear_bottleneck.1']
    #allocation8 [shape = 'u8[8192]{0}', space=vmem, size = 0x2000, scoped, tag = 'input window, operand 2, single buffered']
    #allocation9 [shape = 'u8[512]{0}', space=vmem, size = 0x400, scoped, tag = 'input window, operand 3, single buffered']
    #allocation10 [shape = 's32[1]{0}', space=sflag, size = 0x4, scoped, tag = 'scoped memory for linear_bottleneck.1']
    #allocation11 [shape = 'u8[32768]{0}', space=vmem, size = 0x8000, scoped, tag = 'input window, operand 4, single buffered']
    #allocation12 [shape = 'u8[512]{0}', space=vmem, size = 0x400, scoped, tag = 'input window, operand 5, single buffered']
    #allocation13 [shape = 's32[1]{0}', space=sflag, size = 0x4, scoped, tag = 'scoped memory for linear_bottleneck.1']
    #allocation14 [shape = 'u8[131072]{0}', space=vmem, size = 0x20000, scoped, tag = 'output window, operand 0']
    %11 = vsyncpa [#allocation4], 0
    %s12 = scalar_lea.sflag [#allocation4], 1
    %13 = vsyncpa %s12, 0
    %14 = vsyncpa [#allocation7], 0
    %15 = vsyncpa [#allocation10], 0
    %16 = vsyncpa [#allocation13], 0
    %17 = vsyncpa [#allocation5], 0
    %s18 = scalar_lea.sflag [#allocation5], 1
    %19 = vsyncpa %s18, 0
    loop: start=0, step=1, limit=6
    $region2: #{linear_bottleneck.1} parent=1 // loop_pre_header
      _
    $region3: #{linear_bottleneck.1} parent=1 // loop_header
      %s21 = sphi 0, %s25
      %p22 = scmp.ge.s32.totalorder %s21, 6
      %s28 = sphi 0, %s40
      %s29 = sphi 0, %s36
      %s30 = sphi 0, %s28
      %s31 = sphi 0, %s29
      %s32 = sphi 0, %s30
      %s33 = sphi 0, %s31
      %s43 = sphi 0, %s45
      %s46 = sphi 0, %s43
      %s47 = sphi 0, %s46
      %s63 = sphi 0, %s47
      %s67 = sphi 0, %s67
      %s69 = sphi 0, %s67
      %s70 = sphi 0, %s69
      %s84 = sphi 0, %s70
      %s88 = sphi 0, %s88
      %s90 = sphi 0, %s88
      %s91 = sphi 0, %s90
      %s105 = sphi 0, %s91
      %s109 = sphi 0, %s109
      %s111 = sphi 0, %s109
      %s112 = sphi 0, %s111
      %s126 = sphi 0, %s112
      %s130 = sphi 0, %s130
      %s132 = sphi 0, %s130
      %s133 = sphi 0, %s132
      %s147 = sphi 0, %s133
      %s151 = sphi 0, %s151
      %s153 = sphi 0, %s151
      %s154 = sphi 0, %s153
      %s168 = sphi 0, %s154
      %s176 = sphi 0, %s178
      %s179 = sphi 0, %s176
      %s180 = sphi 0, %s179
      %s196 = sphi 0, %s180
    $region4: #{linear_bottleneck.1} parent=1 // loop_header_branch
      %24 = sbr.rel (%p22) target = $region8
    $region5: #{linear_bottleneck.1} parent=1 // loop_body
      %s26 = ssub.s32 %s21, 1
      %s27 = ssub.s32 %s21, 2
      %s34 = sadd.s32 1, %s29
      %p35 = scmp.ge.s32.totalorder %s34, 2
      %s36 = scalar_select %p35, 0, %s34
      %s37 = sadd.s32 1, %s28
      %s38 = scalar_select %p35, %s37, %s28
      %p39 = scmp.ge.s32.totalorder %s38, 2
      %s40 = scalar_select %p39, 0, %s38
      %s41 = ssub.s32 %s28, %s40
      %p42 = scmp.eq.s32.totalorder %s41, 0
      %s44 = sadd.s32 %s43, 1
      %s45 = scalar_select %p42, %s43, %s44
      %p48 = pneg %p42
      %p49 = scmp.eq.s32.totalorder %s21, 3
      %p50 = por %p48, %p49
      %p51 = scmp.ne.s32.totalorder %s43, %s46
      %p52 = scmp.eq.s32.totalorder %s21, 0
      %p53 = por %p51, %p52
      %p54 = scmp.ne.s32.totalorder %s43, %s46
      %p55 = scmp.eq.s32.totalorder %s26, 3
      %p56 = por %p54, %p55
      %p57 = scmp.ne.s32.totalorder %s46, %s47
      %p58 = scmp.eq.s32.totalorder %s26, 0
      %p59 = por %p57, %p58
      %p60 = scmp.ne.s32.totalorder %s46, %s47
      %p61 = scmp.eq.s32.totalorder %s27, 3
      %p62 = por %p60, %p61
      %p64 = scmp.ne.s32.totalorder %s47, %s63
      %p65 = scmp.eq.s32.totalorder %s27, 0
      %p66 = por %p64, %p65
      %s68 = sadd.s32 %s67, 1
      %p71 = scmp.eq.s32.totalorder %s21, 3
      %p72 = scmp.ne.s32.totalorder %s67, %s69
      %p73 = scmp.eq.s32.totalorder %s21, 0
      %p74 = por %p72, %p73
      %p75 = scmp.ne.s32.totalorder %s67, %s69
      %p76 = scmp.eq.s32.totalorder %s26, 3
      %p77 = por %p75, %p76
      %p78 = scmp.ne.s32.totalorder %s69, %s70
      %p79 = scmp.eq.s32.totalorder %s26, 0
      %p80 = por %p78, %p79
      %p81 = scmp.ne.s32.totalorder %s69, %s70
      %p82 = scmp.eq.s32.totalorder %s27, 3
      %p83 = por %p81, %p82
      %p85 = scmp.ne.s32.totalorder %s70, %s84
      %p86 = scmp.eq.s32.totalorder %s27, 0
      %p87 = por %p85, %p86
      %s89 = sadd.s32 %s88, 1
      %p92 = scmp.eq.s32.totalorder %s21, 3
      %p93 = scmp.ne.s32.totalorder %s88, %s90
      %p94 = scmp.eq.s32.totalorder %s21, 0
      %p95 = por %p93, %p94
      %p96 = scmp.ne.s32.totalorder %s88, %s90
      %p97 = scmp.eq.s32.totalorder %s26, 3
      %p98 = por %p96, %p97
      %p99 = scmp.ne.s32.totalorder %s90, %s91
      %p100 = scmp.eq.s32.totalorder %s26, 0
      %p101 = por %p99, %p100
      %p102 = scmp.ne.s32.totalorder %s90, %s91
      %p103 = scmp.eq.s32.totalorder %s27, 3
      %p104 = por %p102, %p103
      %p106 = scmp.ne.s32.totalorder %s91, %s105
      %p107 = scmp.eq.s32.totalorder %s27, 0
      %p108 = por %p106, %p107
      %s110 = sadd.s32 %s109, 1
      %p113 = scmp.eq.s32.totalorder %s21, 3
      %p114 = scmp.ne.s32.totalorder %s109, %s111
      %p115 = scmp.eq.s32.totalorder %s21, 0
      %p116 = por %p114, %p115
      %p117 = scmp.ne.s32.totalorder %s109, %s111
      %p118 = scmp.eq.s32.totalorder %s26, 3
      %p119 = por %p117, %p118
      %p120 = scmp.ne.s32.totalorder %s111, %s112
      %p121 = scmp.eq.s32.totalorder %s26, 0
      %p122 = por %p120, %p121
      %p123 = scmp.ne.s32.totalorder %s111, %s112
      %p124 = scmp.eq.s32.totalorder %s27, 3
      %p125 = por %p123, %p124
      %p127 = scmp.ne.s32.totalorder %s112, %s126
      %p128 = scmp.eq.s32.totalorder %s27, 0
      %p129 = por %p127, %p128
      %s131 = sadd.s32 %s130, 1
      %p134 = scmp.eq.s32.totalorder %s21, 3
      %p135 = scmp.ne.s32.totalorder %s130, %s132
      %p136 = scmp.eq.s32.totalorder %s21, 0
      %p137 = por %p135, %p136
      %p138 = scmp.ne.s32.totalorder %s130, %s132
      %p139 = scmp.eq.s32.totalorder %s26, 3
      %p140 = por %p138, %p139
      %p141 = scmp.ne.s32.totalorder %s132, %s133
      %p142 = scmp.eq.s32.totalorder %s26, 0
      %p143 = por %p141, %p142
      %p144 = scmp.ne.s32.totalorder %s132, %s133
      %p145 = scmp.eq.s32.totalorder %s27, 3
      %p146 = por %p144, %p145
      %p148 = scmp.ne.s32.totalorder %s133, %s147
      %p149 = scmp.eq.s32.totalorder %s27, 0
      %p150 = por %p148, %p149
      %s152 = sadd.s32 %s151, 1
      %p155 = scmp.eq.s32.totalorder %s21, 3
      %p156 = scmp.ne.s32.totalorder %s151, %s153
      %p157 = scmp.eq.s32.totalorder %s21, 0
      %p158 = por %p156, %p157
      %p159 = scmp.ne.s32.totalorder %s151, %s153
      %p160 = scmp.eq.s32.totalorder %s26, 3
      %p161 = por %p159, %p160
      %p162 = scmp.ne.s32.totalorder %s153, %s154
      %p163 = scmp.eq.s32.totalorder %s26, 0
      %p164 = por %p162, %p163
      %p165 = scmp.ne.s32.totalorder %s153, %s154
      %p166 = scmp.eq.s32.totalorder %s27, 3
      %p167 = por %p165, %p166
      %p169 = scmp.ne.s32.totalorder %s154, %s168
      %p170 = scmp.eq.s32.totalorder %s27, 0
      %p171 = por %p169, %p170
      %s172 = ssub.s32 %s28, %s40
      %s173 = ssub.s32 %s29, %s36
      %s174 = sor.u32 %s172, %s173
      %p175 = scmp.eq.s32.totalorder %s174, 0
      %s177 = sadd.s32 %s176, 1
      %s178 = scalar_select %p175, %s176, %s177
      %p181 = pneg %p175
      %p182 = scmp.eq.s32.totalorder %s21, 3
      %p183 = por %p181, %p182
      %p184 = scmp.ne.s32.totalorder %s176, %s179
      %p185 = scmp.eq.s32.totalorder %s21, 0
      %p186 = por %p184, %p185
      %p187 = scmp.ne.s32.totalorder %s176, %s179
      %p188 = scmp.eq.s32.totalorder %s26, 3
      %p189 = por %p187, %p188
      %p190 = scmp.ne.s32.totalorder %s179, %s180
      %p191 = scmp.eq.s32.totalorder %s26, 0
      %p192 = por %p190, %p191
      %p193 = scmp.ne.s32.totalorder %s179, %s180
      %p194 = scmp.eq.s32.totalorder %s27, 3
      %p195 = por %p193, %p194
      %p197 = scmp.ne.s32.totalorder %s180, %s196
      %p198 = scmp.eq.s32.totalorder %s27, 0
      %p199 = por %p197, %p198
      %p200 = scmp.le.s32.totalorder 1, %s21
      %p201 = scmp.lt.s32.totalorder %s21, 5
      %p202 = pnand %p200, %p201
      %p203 = pneg %p202
      // Predicated region
      $region9: #{linear_bottleneck.1} parent=5 // pred_check
        _
      $region10: #{linear_bottleneck.1} parent=5 // pred_check_branch
        %205 = sbr.rel (%p202) target = $region12
      $region11: #{linear_bottleneck.1} parent=5 // pred_region
        %s206 = ssub.s32 %s21, 1
        // Predicated region
        $region13: #{linear_bottleneck.1} parent=11 // pred_check
          %p207 = pneg %p80
        $region14: #{linear_bottleneck.1} parent=11 // pred_check_branch
          %209 = sbr.rel (%p207) target = $region16
        $region15: #{linear_bottleneck.1} parent=11 // pred_region
          %s211 = ssub.s32 64, 64
          %212 = vsyncadd [#allocation7], %s211
          %s214 = sshll.u32 [#allocation6], 4
          %s215 = int_to_ptr.vmem [resolvable:$true] %s214
          %217 = dma.hbm_to_vmem [thread:$0]  %s1, 64, %s215, [#allocation7]
        $region16: #{linear_bottleneck.1} parent=11 // pred_fallthru
          _
        // Predicated region
        $region17: #{linear_bottleneck.1} parent=11 // pred_check
          %p218 = pneg %p101
        $region18: #{linear_bottleneck.1} parent=11 // pred_check_branch
          %220 = sbr.rel (%p218) target = $region20
        $region19: #{linear_bottleneck.1} parent=11 // pred_region
          %s222 = ssub.s32 256, 256
          %223 = vsyncadd [#allocation7], %s222
          %s224 = sshll.u32 [#allocation8], 4
          %s225 = int_to_ptr.vmem [resolvable:$true] %s224
          %230 = dma.hbm_to_vmem [thread:$0]  %s2, 256, %s225, [#allocation7], 128, 128, 8
        $region20: #{linear_bottleneck.1} parent=11 // pred_fallthru
          _
        // Predicated region
        $region21: #{linear_bottleneck.1} parent=11 // pred_check
          %p231 = pneg %p122
        $region22: #{linear_bottleneck.1} parent=11 // pred_check_branch
          %233 = sbr.rel (%p231) target = $region24
        $region23: #{linear_bottleneck.1} parent=11 // pred_region
          %s235 = ssub.s32 16, 16
          %236 = vsyncadd [#allocation10], %s235
          %s238 = sshll.u32 [#allocation9], 4
          %s239 = int_to_ptr.vmem [resolvable:$true] %s238
          %241 = dma.hbm_to_vmem [thread:$0]  %s3, 16, %s239, [#allocation10]
        $region24: #{linear_bottleneck.1} parent=11 // pred_fallthru
          _
        // Predicated region
        $region25: #{linear_bottleneck.1} parent=11 // pred_check
          %p242 = pneg %p143
        $region26: #{linear_bottleneck.1} parent=11 // pred_check_branch
          %244 = sbr.rel (%p242) target = $region28
        $region27: #{linear_bottleneck.1} parent=11 // pred_region
          %s246 = ssub.s32 1024, 1024
          %247 = vsyncadd [#allocation10], %s246
          %s248 = sshll.u32 [#allocation11], 4
          %s249 = int_to_ptr.vmem [resolvable:$true] %s248
          %254 = dma.hbm_to_vmem [thread:$0]  %s4, 1024, %s249, [#allocation10], 64, 64, 4
        $region28: #{linear_bottleneck.1} parent=11 // pred_fallthru
          _
        // Predicated region
        $region29: #{linear_bottleneck.1} parent=11 // pred_check
          %p255 = pneg %p164
        $region30: #{linear_bottleneck.1} parent=11 // pred_check_branch
          %257 = sbr.rel (%p255) target = $region32
        $region31: #{linear_bottleneck.1} parent=11 // pred_region
          %s259 = ssub.s32 16, 16
          %260 = vsyncadd [#allocation13], %s259
          %s262 = sshll.u32 [#allocation12], 4
          %s263 = int_to_ptr.vmem [resolvable:$true] %s262
          %265 = dma.hbm_to_vmem [thread:$0]  %s5, 16, %s263, [#allocation13]
        $region32: #{linear_bottleneck.1} parent=11 // pred_fallthru
          _
      $region12: #{linear_bottleneck.1} parent=5 // pred_fallthru
        _
      %p266 = scmp.lt.s32.totalorder %s21, 4
      // Predicated region
      $region33: #{linear_bottleneck.1} parent=5 // pred_check
        %p267 = pneg %p266
      $region34: #{linear_bottleneck.1} parent=5 // pred_check_branch
        %269 = sbr.rel (%p267) target = $region36
      $region35: #{linear_bottleneck.1} parent=5 // pred_region
        // Predicated region
        $region37: #{linear_bottleneck.1} parent=35 // pred_check
          %p270 = pneg %p53
        $region38: #{linear_bottleneck.1} parent=35 // pred_check_branch
          %272 = sbr.rel (%p270) target = $region40
        $region39: #{linear_bottleneck.1} parent=35 // pred_region
          %s273 = sand.u32 %s43, 1
          %s274 = scalar_lea.sflag [#allocation4], %s273
          %s275 = sand.u32 %s43, 1
          %s276 = smul.addr %s275, 216
          %s277 = scalar_lea.vmem [#allocation3], %s276
          %s279 = ssub.s32 3456, 3456
          %280 = vsyncadd %s274, %s279
          %s281 = smul.addr %s28, 54
          %s282 = smul.addr %s281, 64
          %s283 = scalar_lea.hbm %s0, %s282
          %s284 = sshll.u32 %s277, 4
          %s285 = int_to_ptr.vmem [resolvable:$true] %s284
          %290 = dma.hbm_to_vmem [thread:$0]  %s283, 3456, %s285, %s274, 64, 64, 4
        $region40: #{linear_bottleneck.1} parent=35 // pred_fallthru
          _
      $region36: #{linear_bottleneck.1} parent=5 // pred_fallthru
        _
      %p291 = scmp.le.s32.totalorder 1, %s21
      %p292 = scmp.lt.s32.totalorder %s21, 5
      %p293 = pnand %p291, %p292
      %p294 = pneg %p293
      // Predicated region
      $region41: #{linear_bottleneck.1} parent=5 // pred_check
        _
      $region42: #{linear_bottleneck.1} parent=5 // pred_check_branch
        %296 = sbr.rel (%p293) target = $region44
      $region43: #{linear_bottleneck.1} parent=5 // pred_region
        %s297 = ssub.s32 %s21, 1
        %s298 = sand.u32 %s46, 1
        %s299 = scalar_lea.sflag [#allocation4], %s298
        %s300 = sand.u32 %s46, 1
        %s301 = smul.addr %s300, 216
        %s302 = scalar_lea.vmem [#allocation3], %s301
        // Predicated region
        $region45: #{linear_bottleneck.1} parent=43 // pred_check
          %p303 = pneg %p59
        $region46: #{linear_bottleneck.1} parent=43 // pred_check_branch
          %305 = sbr.rel (%p303) target = $region48
        $region47: #{linear_bottleneck.1} parent=43 // pred_region
          %306 = dma.done %s299, 3456
        $region48: #{linear_bottleneck.1} parent=43 // pred_fallthru
          _
        // Predicated region
        $region49: #{linear_bottleneck.1} parent=43 // pred_check
          %p307 = pneg %p80
        $region50: #{linear_bottleneck.1} parent=43 // pred_check_branch
          %309 = sbr.rel (%p307) target = $region52
        $region51: #{linear_bottleneck.1} parent=43 // pred_region
          %310 = dma.done [#allocation7], 64
        $region52: #{linear_bottleneck.1} parent=43 // pred_fallthru
          _
        // Predicated region
        $region53: #{linear_bottleneck.1} parent=43 // pred_check
          %p311 = pneg %p101
        $region54: #{linear_bottleneck.1} parent=43 // pred_check_branch
          %313 = sbr.rel (%p311) target = $region56
        $region55: #{linear_bottleneck.1} parent=43 // pred_region
          %314 = dma.done [#allocation7], 256
        $region56: #{linear_bottleneck.1} parent=43 // pred_fallthru
          _
        // Predicated region
        $region57: #{linear_bottleneck.1} parent=43 // pred_check
          %p315 = pneg %p122
        $region58: #{linear_bottleneck.1} parent=43 // pred_check_branch
          %317 = sbr.rel (%p315) target = $region60
        $region59: #{linear_bottleneck.1} parent=43 // pred_region
          %318 = dma.done [#allocation10], 16
        $region60: #{linear_bottleneck.1} parent=43 // pred_fallthru
          _
        // Predicated region
        $region61: #{linear_bottleneck.1} parent=43 // pred_check
          %p319 = pneg %p143
        $region62: #{linear_bottleneck.1} parent=43 // pred_check_branch
          %321 = sbr.rel (%p319) target = $region64
        $region63: #{linear_bottleneck.1} parent=43 // pred_region
          %322 = dma.done [#allocation10], 1024
        $region64: #{linear_bottleneck.1} parent=43 // pred_fallthru
          _
        // Predicated region
        $region65: #{linear_bottleneck.1} parent=43 // pred_check
          %p323 = pneg %p164
        $region66: #{linear_bottleneck.1} parent=43 // pred_check_branch
          %325 = sbr.rel (%p323) target = $region68
        $region67: #{linear_bottleneck.1} parent=43 // pred_region
          %326 = dma.done [#allocation13], 16
        $region68: #{linear_bottleneck.1} parent=43 // pred_fallthru
          _
        %s327 = sand.u32 %s46, 1
        %s328 = scalar_lea.sflag [#allocation4], %s327
        %s329 = sand.u32 %s46, 1
        %s330 = smul.addr %s329, 216
        %s331 = scalar_lea.vmem [#allocation3], %s330
        %p332 = pneg %p59
        %p333 = pneg %p56
        %p334 = pneg %p80
        %p335 = pneg %p77
        %p336 = pneg %p101
        %p337 = pneg %p98
        %p338 = pneg %p122
        %p339 = pneg %p119
        %p340 = pneg %p143
        %p341 = pneg %p140
        %p342 = pneg %p164
        %p343 = pneg %p161
        %p344 = pneg %p192
        %p345 = pneg %p189
        %s346 = sand.u32 %s179, 1
        %s347 = scalar_lea.sflag [#allocation5], %s346
        %s348 = sand.u32 %s179, 1
        %s349 = smul.addr %s348, 128
        %s350 = scalar_lea.vmem [#allocation14], %s349
        %s351 = smul.u32 16, %s31
        %s353 = smul.u32 %s31, 192
        %s354 = sshra.s32 %s353, 3
        %s355 = sand.u32 %s353, 7
        %s356 = smul.addr %s354, 4
        %s357 = scalar_lea.vmem %s302, %s356 [#allocation3]
        %v358 = vld [vmem:[%s357] sm:$0xf]
        %v359 = vld [vmem:[%s357 + $0x4] sm:$0xf]
        %v360 = vld [vmem:[%s357 + $0x8] sm:$0xf]
        %v361 = vld [vmem:[%s357 + $0xc] sm:$0xf]
        %v362 = vld [vmem:[%s357 + $0x10] sm:$0xf]
        %v363 = vld [vmem:[%s357 + $0x14] sm:$0xf]
        %v364 = vld [vmem:[%s357 + $0x18] sm:$0xf]
        %v365 = vld [vmem:[%s357 + $0x1c] sm:$0xf]
        %v366 = vld [vmem:[%s357 + $0x20] sm:$0xf]
        %v367 = vld [vmem:[%s357 + $0x24] sm:$0xf]
        %v368 = vld [vmem:[%s357 + $0x28] sm:$0xf]
        %v369 = vld [vmem:[%s357 + $0x2c] sm:$0xf]
        %v370 = vld [vmem:[%s357 + $0x30] sm:$0xf]
        %v371 = vld [vmem:[%s357 + $0x34] sm:$0xf]
        %v372 = vld [vmem:[%s357 + $0x38] sm:$0xf]
        %v373 = vld [vmem:[%s357 + $0x3c] sm:$0xf]
        %v374 = vld [vmem:[%s357 + $0x40] sm:$0xf]
        %v375 = vld [vmem:[%s357 + $0x44] sm:$0xf]
        %v376 = vld [vmem:[%s357 + $0x48] sm:$0xf]
        %v377 = vld [vmem:[%s357 + $0x4c] sm:$0xf]
        %v378 = vld [vmem:[%s357 + $0x50] sm:$0xf]
        %v379 = vld [vmem:[%s357 + $0x54] sm:$0xf]
        %v380 = vld [vmem:[%s357 + $0x58] sm:$0xf]
        %v381 = vld [vmem:[%s357 + $0x5c] sm:$0xf]
        %v382 = vld [vmem:[%s357 + $0x60] sm:$0xf]
        %v383 = vld [vmem:[%s357 + $0x64] sm:$0xf]
        %v384 = vld [vmem:[%s357 + $0x68] sm:$0xf]
        %v385 = vld [vmem:[%s357 + $0x6c] sm:$0xf]
        %v386 = vld [vmem:[%s357 + $0x70] sm:$0xf]
        %v387 = vld [vmem:[%s357 + $0x74] sm:$0xf]
        %v388 = vld [vmem:[#allocation6] sm:$0xf]
        %v419 = vunpack.c.l.b16 %v358
        %v420 = vunpack.c.l.b16 %v359
        %v421 = vunpack.c.l.b16 %v360
        %v422 = vunpack.c.l.b16 %v361
        %v423 = vunpack.c.l.b16 %v362
        %v424 = vunpack.c.l.b16 %v363
        %v425 = vunpack.c.l.b16 %v364
        %v426 = vunpack.c.l.b16 %v365
        %v427 = vunpack.c.l.b16 %v366
        %v428 = vunpack.c.l.b16 %v367
        %v429 = vunpack.c.l.b16 %v368
        %v430 = vunpack.c.l.b16 %v369
        %v431 = vunpack.c.l.b16 %v370
        %v432 = vunpack.c.l.b16 %v371
        %v433 = vunpack.c.l.b16 %v372
        %v434 = vunpack.c.l.b16 %v373
        %v435 = vunpack.c.l.b16 %v374
        %v436 = vunpack.c.l.b16 %v375
        %v437 = vunpack.c.l.b16 %v376
        %v438 = vunpack.c.l.b16 %v377
        %v439 = vunpack.c.l.b16 %v378
        %v440 = vunpack.c.l.b16 %v379
        %v441 = vunpack.c.l.b16 %v380
        %v442 = vunpack.c.l.b16 %v381
        %v443 = vunpack.c.l.b16 %v382
        %v444 = vunpack.c.l.b16 %v383
        %v445 = vunpack.c.l.b16 %v384
        %v446 = vunpack.c.l.b16 %v385
        %v447 = vunpack.c.l.b16 %v386
        %v448 = vunpack.c.l.b16 %v387
        %v449 = vpack.c.b16 %v420, %v419
        %v450 = vpack.c.b16 %v422, %v421
        %v451 = vpack.c.b16 %v424, %v423
        %v452 = vpack.c.b16 %v426, %v425
        %v453 = vpack.c.b16 %v428, %v427
        %v454 = vpack.c.b16 %v430, %v429
        %v455 = vpack.c.b16 %v432, %v431
        %v456 = vpack.c.b16 %v434, %v433
        %v457 = vpack.c.b16 %v436, %v435
        %v458 = vpack.c.b16 %v438, %v437
        %v459 = vpack.c.b16 %v440, %v439
        %v460 = vpack.c.b16 %v442, %v441
        %v461 = vpack.c.b16 %v444, %v443
        %v462 = vpack.c.b16 %v446, %v445
        %v463 = vpack.c.b16 %v448, %v447
        %vm464 = vcmask 64512
        %v466 = vsel %vm464, %v449, 0
        %v469 = vsel %vm464, %v450, 0
        %v472 = vsel %vm464, %v451, 0
        %v475 = vsel %vm464, %v452, 0
        %v478 = vsel %vm464, %v453, 0
        %v481 = vsel %vm464, %v454, 0
        %v484 = vsel %vm464, %v455, 0
        %v487 = vsel %vm464, %v456, 0
        %v490 = vsel %vm464, %v457, 0
        %v493 = vsel %vm464, %v458, 0
        %v496 = vsel %vm464, %v459, 0
        %v499 = vsel %vm464, %v460, 0
        %v502 = vsel %vm464, %v461, 0
        %v505 = vsel %vm464, %v462, 0
        %v508 = vsel %vm464, %v463, 0
        %vm510 = vcmask 1043456
        %v512 = vsel %vm510, %v388, 0
        %514 = vmatprep.subr.bf16.mxu0 0
        %515 = vmatpush1.bf16.msra.mxu0 %v512
        %516 = vmatprep.subr.bf16.mxu0 0
        %517 = vmatpush1.bf16.msra.mxu0 0
        %518 = vmatprep.subr.bf16.mxu0 0
        %519 = vmatpush1.bf16.msra.mxu0 0
        %520 = vmatprep.subr.bf16.mxu0 0
        %521 = vmatpush1.bf16.msra.mxu0 0
        %522 = vmatprep.subr.bf16.mxu0 0
        %523 = vmatpush1.bf16.msra.mxu0 0
        %524 = vmatprep.subr.bf16.mxu0 0
        %525 = vmatpush1.bf16.msra.mxu0 0
        %526 = vmatprep.subr.bf16.mxu0 0
        %527 = vmatpush1.bf16.msra.mxu0 0
        %528 = vmatprep.subr.bf16.mxu0 0
        %529 = vmatpush1.bf16.msra.mxu0 0
        %530 = vmatprep.subr.bf16.mxu0 0
        %531 = vmatpush1.bf16.msra.mxu0 0
        %532 = vmatprep.subr.bf16.mxu0 0
        %533 = vmatpush1.bf16.msra.mxu0 0
        %534 = vmatprep.subr.bf16.mxu0 0
        %535 = vmatpush1.bf16.msra.mxu0 0
        %536 = vmatprep.subr.bf16.mxu0 0
        %537 = vmatpush1.bf16.msra.mxu0 0
        %538 = vmatprep.subr.bf16.mxu0 0
        %539 = vmatpush1.bf16.msra.mxu0 0
        %540 = vmatprep.subr.bf16.mxu0 0
        %541 = vmatpush1.bf16.msra.mxu0 0
        %542 = vmatprep.subr.bf16.mxu0 0
        %543 = vmatpush1.bf16.msra.mxu0 0
        %544 = vmatprep.subr.bf16.mxu0 0
        %545 = vmatpush1.bf16.msra.mxu0 0
        %546 = vmatprep.mubr.bf16.mxu0 0
        %547 = vmatmul.mubr.bf16.gmra.mrb[0].mxu0 %v466
        %v548 = vpop.f32.mrb[0].mxu0
        %v549 = vadd.f32 0.0, %v548
        %v550 = vpop.f32.mrb[0].mxu0
        %v551 = vpop.f32.mrb[0].mxu0
        %v552 = vadd.f32 0.0, %v551
        %v553 = vpop.f32.mrb[0].mxu0
        %554 = vmatprep.mubr.bf16.mxu0 0
        %555 = vmatmul.mubr.bf16.gmra.mrb[0].mxu0 %v469
        %v556 = vpop.f32.mrb[0].mxu0
        %v557 = vadd.f32 0.0, %v556
        %v558 = vpop.f32.mrb[0].mxu0
        %v559 = vpop.f32.mrb[0].mxu0
        %v560 = vadd.f32 0.0, %v559
        %v561 = vpop.f32.mrb[0].mxu0
        %562 = vmatprep.mubr.bf16.mxu0 0
        %563 = vmatmul.mubr.bf16.gmra.mrb[0].mxu0 %v472
        %v564 = vpop.f32.mrb[0].mxu0
        %v565 = vadd.f32 0.0, %v564
        %v566 = vpop.f32.mrb[0].mxu0
        %v567 = vpop.f32.mrb[0].mxu0
        %v568 = vadd.f32 0.0, %v567
        %v569 = vpop.f32.mrb[0].mxu0
        %570 = vmatprep.mubr.bf16.mxu0 0
        %571 = vmatmul.mubr.bf16.gmra.mrb[0].mxu0 %v475
        %v572 = vpop.f32.mrb[0].mxu0
        %v573 = vadd.f32 0.0, %v572
        %v574 = vpop.f32.mrb[0].mxu0
        %v575 = vpop.f32.mrb[0].mxu0
        %v576 = vadd.f32 0.0, %v575
        %v577 = vpop.f32.mrb[0].mxu0
        %578 = vmatprep.mubr.bf16.mxu0 0
        %579 = vmatmul.mubr.bf16.gmra.mrb[0].mxu0 %v478
        %v580 = vpop.f32.mrb[0].mxu0
        %v581 = vadd.f32 0.0, %v580
        %v582 = vpop.f32.mrb[0].mxu0
        %v583 = vpop.f32.mrb[0].mxu0
        %v584 = vadd.f32 0.0, %v583
        %v585 = vpop.f32.mrb[0].mxu0
        %586 = vmatprep.mubr.bf16.mxu0 0
        %587 = vmatmul.mubr.bf16.gmra.mrb[0].mxu0 %v481
        %v588 = vpop.f32.mrb[0].mxu0
        %v589 = vadd.f32 0.0, %v588
        %v590 = vpop.f32.mrb[0].mxu0
        %v591 = vpop.f32.mrb[0].mxu0
        %v592 = vadd.f32 0.0, %v591
        %v593 = vpop.f32.mrb[0].mxu0
        %594 = vmatprep.mubr.bf16.mxu0 0
        %595 = vmatmul.mubr.bf16.gmra.mrb[0].mxu0 %v484
        %v596 = vpop.f32.mrb[0].mxu0
        %v597 = vadd.f32 0.0, %v596
        %v598 = vpop.f32.mrb[0].mxu0
        %v599 = vpop.f32.mrb[0].mxu0
        %v600 = vadd.f32 0.0, %v599
        %v601 = vpop.f32.mrb[0].mxu0
        %602 = vmatprep.mubr.bf16.mxu0 0
        %603 = vmatmul.mubr.bf16.gmra.mrb[0].mxu0 %v487
        %v604 = vpop.f32.mrb[0].mxu0
        %v605 = vadd.f32 0.0, %v604
        %v606 = vpop.f32.mrb[0].mxu0
        %v607 = vpop.f32.mrb[0].mxu0
        %v608 = vadd.f32 0.0, %v607
        %v609 = vpop.f32.mrb[0].mxu0
        %610 = vmatprep.mubr.bf16.mxu0 0
        %611 = vmatmul.mubr.bf16.gmra.mrb[0].mxu0 %v490
        %v612 = vpop.f32.mrb[0].mxu0
        %v613 = vadd.f32 0.0, %v612
        %v614 = vpop.f32.mrb[0].mxu0
        %v615 = vpop.f32.mrb[0].mxu0
        %v616 = vadd.f32 0.0, %v615
        %v617 = vpop.f32.mrb[0].mxu0
        %618 = vmatprep.mubr.bf16.mxu0 0
        %619 = vmatmul.mubr.bf16.gmra.mrb[0].mxu0 %v493
        %v620 = vpop.f32.mrb[0].mxu0
        %v621 = vadd.f32 0.0, %v620
        %v622 = vpop.f32.mrb[0].mxu0
        %v623 = vpop.f32.mrb[0].mxu0
        %v624 = vadd.f32 0.0, %v623
        %v625 = vpop.f32.mrb[0].mxu0
        %626 = vmatprep.mubr.bf16.mxu0 0
        %627 = vmatmul.mubr.bf16.gmra.mrb[0].mxu0 %v496
        %v628 = vpop.f32.mrb[0].mxu0
        %v629 = vadd.f32 0.0, %v628
        %v630 = vpop.f32.mrb[0].mxu0
        %v631 = vpop.f32.mrb[0].mxu0
        %v632 = vadd.f32 0.0, %v631
        %v633 = vpop.f32.mrb[0].mxu0
        %634 = vmatprep.mubr.bf16.mxu0 0
        %635 = vmatmul.mubr.bf16.gmra.mrb[0].mxu0 %v499
        %v636 = vpop.f32.mrb[0].mxu0
        %v637 = vadd.f32 0.0, %v636
        %v638 = vpop.f32.mrb[0].mxu0
        %v639 = vpop.f32.mrb[0].mxu0
        %v640 = vadd.f32 0.0, %v639
        %v641 = vpop.f32.mrb[0].mxu0
        %642 = vmatprep.mubr.bf16.mxu0 0
        %643 = vmatmul.mubr.bf16.gmra.mrb[0].mxu0 %v502
        %v644 = vpop.f32.mrb[0].mxu0
        %v645 = vadd.f32 0.0, %v644
        %v646 = vpop.f32.mrb[0].mxu0
        %v647 = vpop.f32.mrb[0].mxu0
        %v648 = vadd.f32 0.0, %v647
        %v649 = vpop.f32.mrb[0].mxu0
        %650 = vmatprep.mubr.bf16.mxu0 0
        %651 = vmatmul.mubr.bf16.gmra.mrb[0].mxu0 %v505
        %v652 = vpop.f32.mrb[0].mxu0
        %v653 = vadd.f32 0.0, %v652
        %v654 = vpop.f32.mrb[0].mxu0
        %v655 = vpop.f32.mrb[0].mxu0
        %v656 = vadd.f32 0.0, %v655
        %v657 = vpop.f32.mrb[0].mxu0
        %658 = vmatprep.mubr.bf16.mxu0 0
        %659 = vmatmul.mubr.bf16.gmra.mrb[0].mxu0 %v508
        %v660 = vpop.f32.mrb[0].mxu0
        %v661 = vadd.f32 0.0, %v660
        %v662 = vpop.f32.mrb[0].mxu0
        %v663 = vpop.f32.mrb[0].mxu0
        %v664 = vadd.f32 0.0, %v663
        %v665 = vpop.f32.mrb[0].mxu0
        %666 = vdwg.mxu0
        %v667 = vmax.f32 %v549, 0.0
        %v668 = vmax.f32 %v552, 0.0
        %v669 = vmax.f32 %v557, 0.0
        %v670 = vmax.f32 %v560, 0.0
        %v671 = vmax.f32 %v565, 0.0
        %v672 = vmax.f32 %v568, 0.0
        %v673 = vmax.f32 %v573, 0.0
        %v674 = vmax.f32 %v576, 0.0
        %v675 = vmax.f32 %v581, 0.0
        %v676 = vmax.f32 %v584, 0.0
        %v677 = vmax.f32 %v589, 0.0
        %v678 = vmax.f32 %v592, 0.0
        %v679 = vmax.f32 %v597, 0.0
        %v680 = vmax.f32 %v600, 0.0
        %v681 = vmax.f32 %v605, 0.0
        %v682 = vmax.f32 %v608, 0.0
        %v683 = vmax.f32 %v613, 0.0
        %v684 = vmax.f32 %v616, 0.0
        %v685 = vmax.f32 %v621, 0.0
        %v686 = vmax.f32 %v624, 0.0
        %v687 = vmax.f32 %v629, 0.0
        %v688 = vmax.f32 %v632, 0.0
        %v689 = vmax.f32 %v637, 0.0
        %v690 = vmax.f32 %v640, 0.0
        %v691 = vmax.f32 %v645, 0.0
        %v692 = vmax.f32 %v648, 0.0
        %v693 = vmax.f32 %v653, 0.0
        %v694 = vmax.f32 %v656, 0.0
        %v695 = vmax.f32 %v661, 0.0
        %v696 = vmax.f32 %v664, 0.0
        %v697 = vmin.f32 %v667, 6.0
        %v698 = vmin.f32 %v668, 6.0
        %v699 = vmin.f32 %v669, 6.0
        %v700 = vmin.f32 %v670, 6.0
        %v701 = vmin.f32 %v671, 6.0
        %v702 = vmin.f32 %v672, 6.0
        %v703 = vmin.f32 %v673, 6.0
        %v704 = vmin.f32 %v674, 6.0
        %v705 = vmin.f32 %v675, 6.0
        %v706 = vmin.f32 %v676, 6.0
        %v707 = vmin.f32 %v677, 6.0
        %v708 = vmin.f32 %v678, 6.0
        %v709 = vmin.f32 %v679, 6.0
        %v710 = vmin.f32 %v680, 6.0
        %v711 = vmin.f32 %v681, 6.0
        %v712 = vmin.f32 %v682, 6.0
        %v713 = vmin.f32 %v683, 6.0
        %v714 = vmin.f32 %v684, 6.0
        %v715 = vmin.f32 %v685, 6.0
        %v716 = vmin.f32 %v686, 6.0
        %v717 = vmin.f32 %v687, 6.0
        %v718 = vmin.f32 %v688, 6.0
        %v719 = vmin.f32 %v689, 6.0
        %v720 = vmin.f32 %v690, 6.0
        %v721 = vmin.f32 %v691, 6.0
        %v722 = vmin.f32 %v692, 6.0
        %v723 = vmin.f32 %v693, 6.0
        %v724 = vmin.f32 %v694, 6.0
        %v725 = vmin.f32 %v695, 6.0
        %v726 = vmin.f32 %v696, 6.0
        %v727 = vpack.c.bf16 %v698, %v697
        %v728 = vpack.c.bf16 %v699, %v699
        %v729 = vpack.c.bf16 %v701, %v700
        %v730 = vpack.c.bf16 %v702, %v702
        %v731 = vpack.c.bf16 %v704, %v703
        %v732 = vpack.c.bf16 %v705, %v705
        %v733 = vpack.c.bf16 %v707, %v706
        %v734 = vpack.c.bf16 %v708, %v708
        %v735 = vpack.c.bf16 %v710, %v709
        %v736 = vpack.c.bf16 %v711, %v711
        %v737 = vpack.c.bf16 %v713, %v712
        %v738 = vpack.c.bf16 %v714, %v714
        %v739 = vpack.c.bf16 %v716, %v715
        %v740 = vpack.c.bf16 %v717, %v717
        %v741 = vpack.c.bf16 %v719, %v718
        %v742 = vpack.c.bf16 %v720, %v720
        %v743 = vpack.c.bf16 %v722, %v721
        %v744 = vpack.c.bf16 %v723, %v723
        %v745 = vpack.c.bf16 %v725, %v724
        %v746 = vpack.c.bf16 %v726, %v726
        %v767 = vunpack.c.l.b16 %v727
        %v768 = vunpack.c.h.b16 %v727
        %v769 = vunpack.c.l.b16 %v728
        %v770 = vunpack.c.l.b16 %v729
        %v771 = vunpack.c.h.b16 %v729
        %v772 = vunpack.c.l.b16 %v730
        %v773 = vunpack.c.l.b16 %v731
        %v774 = vunpack.c.h.b16 %v731
        %v775 = vunpack.c.l.b16 %v732
        %v776 = vunpack.c.l.b16 %v733
        %v777 = vunpack.c.h.b16 %v733
        %v778 = vunpack.c.l.b16 %v734
        %v779 = vunpack.c.l.b16 %v735
        %v780 = vunpack.c.h.b16 %v735
        %v781 = vunpack.c.l.b16 %v736
        %v782 = vunpack.c.l.b16 %v737
        %v783 = vunpack.c.h.b16 %v737
        %v784 = vunpack.c.l.b16 %v738
        %v785 = vunpack.c.l.b16 %v739
        %v786 = vunpack.c.h.b16 %v739
        %v787 = vunpack.c.l.b16 %v740
        %v788 = vunpack.c.l.b16 %v741
        %v789 = vunpack.c.h.b16 %v741
        %v790 = vunpack.c.l.b16 %v742
        %v791 = vunpack.c.l.b16 %v743
        %v792 = vunpack.c.h.b16 %v743
        %v793 = vunpack.c.l.b16 %v744
        %v794 = vunpack.c.l.b16 %v745
        %v795 = vunpack.c.h.b16 %v745
        %v796 = vunpack.c.l.b16 %v746
        %v797 = vpack.c.b16 %v767, %v767
        %v798 = vpack.c.b16 %v768, %v768
        %v799 = vpack.c.b16 %v769, %v769
        %v800 = vpack.c.b16 %v770, %v770
        %v801 = vpack.c.b16 %v771, %v771
        %v802 = vpack.c.b16 %v772, %v772
        %v803 = vpack.c.b16 %v773, %v773
        %v804 = vpack.c.b16 %v774, %v774
        %v805 = vpack.c.b16 %v775, %v775
        %v806 = vpack.c.b16 %v776, %v776
        %v807 = vpack.c.b16 %v777, %v777
        %v808 = vpack.c.b16 %v778, %v778
        %v809 = vpack.c.b16 %v779, %v779
        %v810 = vpack.c.b16 %v780, %v780
        %v811 = vpack.c.b16 %v781, %v781
        %v812 = vpack.c.b16 %v782, %v782
        %v813 = vpack.c.b16 %v783, %v783
        %v814 = vpack.c.b16 %v784, %v784
        %v815 = vpack.c.b16 %v785, %v785
        %v816 = vpack.c.b16 %v786, %v786
        %v817 = vpack.c.b16 %v787, %v787
        %v818 = vpack.c.b16 %v788, %v788
        %v819 = vpack.c.b16 %v789, %v789
        %v820 = vpack.c.b16 %v790, %v790
        %v821 = vpack.c.b16 %v791, %v791
        %v822 = vpack.c.b16 %v792, %v792
        %v823 = vpack.c.b16 %v793, %v793
        %v824 = vpack.c.b16 %v794, %v794
        %v825 = vpack.c.b16 %v795, %v795
        %v826 = vpack.c.b16 %v796, %v796
        %857 = vst [vmem:[#allocation2] sm:$0xf] %v797
        %858 = vst [vmem:[#allocation2 + $0x4] sm:$0xf] %v798
        %859 = vst [vmem:[#allocation2 + $0x8] sm:$0xf] %v799
        %860 = vst [vmem:[#allocation2 + $0xc] sm:$0xf] %v800
        %861 = vst [vmem:[#allocation2 + $0x10] sm:$0xf] %v801
        %862 = vst [vmem:[#allocation2 + $0x14] sm:$0xf] %v802
        %863 = vst [vmem:[#allocation2 + $0x18] sm:$0xf] %v803
        %864 = vst [vmem:[#allocation2 + $0x1c] sm:$0xf] %v804
        %865 = vst [vmem:[#allocation2 + $0x20] sm:$0xf] %v805
        %866 = vst [vmem:[#allocation2 + $0x24] sm:$0xf] %v806
        %867 = vst [vmem:[#allocation2 + $0x28] sm:$0xf] %v807
        %868 = vst [vmem:[#allocation2 + $0x2c] sm:$0xf] %v808
        %869 = vst [vmem:[#allocation2 + $0x30] sm:$0xf] %v809
        %870 = vst [vmem:[#allocation2 + $0x34] sm:$0xf] %v810
        %871 = vst [vmem:[#allocation2 + $0x38] sm:$0xf] %v811
        %872 = vst [vmem:[#allocation2 + $0x3c] sm:$0xf] %v812
        %873 = vst [vmem:[#allocation2 + $0x40] sm:$0xf] %v813
        %874 = vst [vmem:[#allocation2 + $0x44] sm:$0xf] %v814
        %875 = vst [vmem:[#allocation2 + $0x48] sm:$0xf] %v815
        %876 = vst [vmem:[#allocation2 + $0x4c] sm:$0xf] %v816
        %877 = vst [vmem:[#allocation2 + $0x50] sm:$0xf] %v817
        %878 = vst [vmem:[#allocation2 + $0x54] sm:$0xf] %v818
        %879 = vst [vmem:[#allocation2 + $0x58] sm:$0xf] %v819
        %880 = vst [vmem:[#allocation2 + $0x5c] sm:$0xf] %v820
        %881 = vst [vmem:[#allocation2 + $0x60] sm:$0xf] %v821
        %882 = vst [vmem:[#allocation2 + $0x64] sm:$0xf] %v822
        %883 = vst [vmem:[#allocation2 + $0x68] sm:$0xf] %v823
        %884 = vst [vmem:[#allocation2 + $0x6c] sm:$0xf] %v824
        %885 = vst [vmem:[#allocation2 + $0x70] sm:$0xf] %v825
        %886 = vst [vmem:[#allocation2 + $0x74] sm:$0xf] %v826
        %v887 = vld [vmem:[#allocation2] sm:$0xf]
        %v888 = vld [vmem:[#allocation2 + $0x4] sm:$0xf]
        %v889 = vld [vmem:[#allocation2 + $0x8] sm:$0xf]
        %v890 = vld [vmem:[#allocation2 + $0xc] sm:$0xf]
        %v891 = vld [vmem:[#allocation2 + $0x10] sm:$0xf]
        %v892 = vld [vmem:[#allocation2 + $0x14] sm:$0xf]
        %v893 = vld [vmem:[#allocation2 + $0x18] sm:$0xf]
        %v894 = vld [vmem:[#allocation2 + $0x1c] sm:$0xf]
        %v895 = vld [vmem:[#allocation2 + $0x20] sm:$0xf]
        %v896 = vld [vmem:[#allocation2 + $0x24] sm:$0xf]
        %v897 = vld [vmem:[#allocation2 + $0x28] sm:$0xf]
        %v898 = vld [vmem:[#allocation2 + $0x2c] sm:$0xf]
        %v899 = vld [vmem:[#allocation2 + $0x30] sm:$0xf]
        %v900 = vld [vmem:[#allocation2 + $0x34] sm:$0xf]
        %v901 = vld [vmem:[#allocation2 + $0x38] sm:$0xf]
        %v902 = vld [vmem:[#allocation2 + $0x3c] sm:$0xf]
        %v903 = vld [vmem:[#allocation2 + $0x40] sm:$0xf]
        %v904 = vld [vmem:[#allocation2 + $0x44] sm:$0xf]
        %v905 = vld [vmem:[#allocation2 + $0x48] sm:$0xf]
        %v906 = vld [vmem:[#allocation2 + $0x4c] sm:$0xf]
        %v907 = vld [vmem:[#allocation2 + $0x50] sm:$0xf]
        %v908 = vld [vmem:[#allocation2 + $0x54] sm:$0xf]
        %v909 = vld [vmem:[#allocation2 + $0x58] sm:$0xf]
        %v910 = vld [vmem:[#allocation2 + $0x5c] sm:$0xf]
        %v911 = vunpack.c.l.bf16 %v887
        %v912 = vunpack.c.l.bf16 %v888
        %v913 = vunpack.c.l.bf16 %v890
        %v914 = vunpack.c.l.bf16 %v891
        %v915 = vunpack.c.l.bf16 %v893
        %v916 = vunpack.c.l.bf16 %v894
        %v917 = vunpack.c.l.bf16 %v896
        %v918 = vunpack.c.l.bf16 %v897
        %v919 = vunpack.c.l.bf16 %v899
        %v920 = vunpack.c.l.bf16 %v900
        %v921 = vunpack.c.l.bf16 %v902
        %v922 = vunpack.c.l.bf16 %v903
        %v923 = vunpack.c.l.bf16 %v905
        %v924 = vunpack.c.l.bf16 %v906
        %v925 = vunpack.c.l.bf16 %v908
        %v926 = vunpack.c.l.bf16 %v909
        %v927 = vld [vmem:[#allocation8] sm:$0x1]
        %v928 = vlaneseq
        %v929 = vshrl.u32 %v928, 7
        %v930 = vsub.s32 0, %v929
        %v931 = vrot.slane %v927, %v930
        %v932 = vmul.f32 %v911, %v931
        %v933 = vmul.f32 %v912, %v931
        %v934 = vmul.f32 %v913, %v931
        %v935 = vmul.f32 %v914, %v931
        %v936 = vmul.f32 %v915, %v931
        %v937 = vmul.f32 %v916, %v931
        %v938 = vmul.f32 %v917, %v931
        %v939 = vmul.f32 %v918, %v931
        %v940 = vmul.f32 %v919, %v931
        %v941 = vmul.f32 %v920, %v931
        %v942 = vmul.f32 %v921, %v931
        %v943 = vmul.f32 %v922, %v931
        %v944 = vmul.f32 %v923, %v931
        %v945 = vmul.f32 %v924, %v931
        %v946 = vmul.f32 %v925, %v931
        %v947 = vmul.f32 %v926, %v931
        %v948 = vadd.f32 %v932, 0.0
        %v949 = vadd.f32 %v933, 0.0
        %v950 = vadd.f32 %v934, 0.0
        %v951 = vadd.f32 %v935, 0.0
        %v952 = vadd.f32 %v936, 0.0
        %v953 = vadd.f32 %v937, 0.0
        %v954 = vadd.f32 %v938, 0.0
        %v955 = vadd.f32 %v939, 0.0
        %v956 = vadd.f32 %v940, 0.0
        %v957 = vadd.f32 %v941, 0.0
        %v958 = vadd.f32 %v942, 0.0
        %v959 = vadd.f32 %v943, 0.0
        %v960 = vadd.f32 %v944, 0.0
        %v961 = vadd.f32 %v945, 0.0
        %v962 = vadd.f32 %v946, 0.0
        %v963 = vadd.f32 %v947, 0.0
        %v964 = vunpack.c.l.bf16 %v889
        %v965 = vunpack.c.l.bf16 %v892
        %v966 = vunpack.c.l.bf16 %v895
        %v967 = vunpack.c.l.bf16 %v898
        %v968 = vunpack.c.l.bf16 %v901
        %v969 = vunpack.c.l.bf16 %v904
        %v970 = vunpack.c.l.bf16 %v907
        %v971 = vunpack.c.l.bf16 %v910
        %v972 = vld [vmem:[#allocation8 + $0x1] sm:$0x1]
        %v973 = vlaneseq
        %v974 = vshrl.u32 %v973, 7
        %v975 = vsub.s32 0, %v974
        %v976 = vrot.slane %v972, %v975
        %v977 = vmul.f32 %v911, %v976
        %v978 = vmul.f32 %v912, %v976
        %v979 = vmul.f32 %v964, %v976
        %v980 = vmul.f32 %v913, %v976
        %v981 = vmul.f32 %v914, %v976
        %v982 = vmul.f32 %v965, %v976
        %v983 = vmul.f32 %v915, %v976
        %v984 = vmul.f32 %v916, %v976
        %v985 = vmul.f32 %v966, %v976
        %v986 = vmul.f32 %v917, %v976
        %v987 = vmul.f32 %v918, %v976
        %v988 = vmul.f32 %v967, %v976
        %v989 = vmul.f32 %v919, %v976
        %v990 = vmul.f32 %v920, %v976
        %v991 = vmul.f32 %v968, %v976
        %v992 = vmul.f32 %v921, %v976
        %v993 = vmul.f32 %v922, %v976
        %v994 = vmul.f32 %v969, %v976
        %v995 = vmul.f32 %v923, %v976
        %v996 = vmul.f32 %v924, %v976
        %v997 = vmul.f32 %v970, %v976
        %v998 = vmul.f32 %v925, %v976
        %v999 = vmul.f32 %v926, %v976
        %v1000 = vmul.f32 %v971, %v976
        %vm1025 = vcmask 1046528
        %v1026 = vrot.slane %v977, 1
        %v1027 = vrot.slane %v978, 1
        %v1028 = vsel %vm1025, %v1026, %v1027
        %v1029 = vrot.slane %v979, 1
        %v1030 = vsel %vm1025, %v1027, %v1029
        %v1031 = vrot.slane %v980, 1
        %v1032 = vrot.slane %v981, 1
        %v1033 = vsel %vm1025, %v1031, %v1032
        %v1034 = vrot.slane %v982, 1
        %v1035 = vsel %vm1025, %v1032, %v1034
        %v1036 = vrot.slane %v983, 1
        %v1037 = vrot.slane %v984, 1
        %v1038 = vsel %vm1025, %v1036, %v1037
        %v1039 = vrot.slane %v985, 1
        %v1040 = vsel %vm1025, %v1037, %v1039
        %v1041 = vrot.slane %v986, 1
        %v1042 = vrot.slane %v987, 1
        %v1043 = vsel %vm1025, %v1041, %v1042
        %v1044 = vrot.slane %v988, 1
        %v1045 = vsel %vm1025, %v1042, %v1044
        %v1046 = vrot.slane %v989, 1
        %v1047 = vrot.slane %v990, 1
        %v1048 = vsel %vm1025, %v1046, %v1047
        %v1049 = vrot.slane %v991, 1
        %v1050 = vsel %vm1025, %v1047, %v1049
        %v1051 = vrot.slane %v992, 1
        %v1052 = vrot.slane %v993, 1
        %v1053 = vsel %vm1025, %v1051, %v1052
        %v1054 = vrot.slane %v994, 1
        %v1055 = vsel %vm1025, %v1052, %v1054
        %v1056 = vrot.slane %v995, 1
        %v1057 = vrot.slane %v996, 1
        %v1058 = vsel %vm1025, %v1056, %v1057
        %v1059 = vrot.slane %v997, 1
        %v1060 = vsel %vm1025, %v1057, %v1059
        %v1061 = vrot.slane %v998, 1
        %v1062 = vrot.slane %v999, 1
        %v1063 = vsel %vm1025, %v1061, %v1062
        %v1064 = vrot.slane %v1000, 1
        %v1065 = vsel %vm1025, %v1062, %v1064
        %v1082 = vadd.f32 %v948, %v1028
        %v1083 = vadd.f32 %v949, %v1030
        %v1084 = vadd.f32 %v950, %v1033
        %v1085 = vadd.f32 %v951, %v1035
        %v1086 = vadd.f32 %v952, %v1038
        %v1087 = vadd.f32 %v953, %v1040
        %v1088 = vadd.f32 %v954, %v1043
        %v1089 = vadd.f32 %v955, %v1045
        %v1090 = vadd.f32 %v956, %v1048
        %v1091 = vadd.f32 %v957, %v1050
        %v1092 = vadd.f32 %v958, %v1053
        %v1093 = vadd.f32 %v959, %v1055
        %v1094 = vadd.f32 %v960, %v1058
        %v1095 = vadd.f32 %v961, %v1060
        %v1096 = vadd.f32 %v962, %v1063
        %v1097 = vadd.f32 %v963, %v1065
        %v1098 = vld [vmem:[#allocation8 + $0x2] sm:$0x1]
        %v1099 = vlaneseq
        %v1100 = vshrl.u32 %v1099, 7
        %v1101 = vsub.s32 0, %v1100
        %v1102 = vrot.slane %v1098, %v1101
        %v1103 = vmul.f32 %v911, %v1102
        %v1104 = vmul.f32 %v912, %v1102
        %v1105 = vmul.f32 %v964, %v1102
        %v1106 = vmul.f32 %v913, %v1102
        %v1107 = vmul.f32 %v914, %v1102
        %v1108 = vmul.f32 %v965, %v1102
        %v1109 = vmul.f32 %v915, %v1102
        %v1110 = vmul.f32 %v916, %v1102
        %v1111 = vmul.f32 %v966, %v1102
        %v1112 = vmul.f32 %v917, %v1102
        %v1113 = vmul.f32 %v918, %v1102
        %v1114 = vmul.f32 %v967, %v1102
        %v1115 = vmul.f32 %v919, %v1102
        %v1116 = vmul.f32 %v920, %v1102
        %v1117 = vmul.f32 %v968, %v1102
        %v1118 = vmul.f32 %v921, %v1102
        %v1119 = vmul.f32 %v922, %v1102
        %v1120 = vmul.f32 %v969, %v1102
        %v1121 = vmul.f32 %v923, %v1102
        %v1122 = vmul.f32 %v924, %v1102
        %v1123 = vmul.f32 %v970, %v1102
        %v1124 = vmul.f32 %v925, %v1102
        %v1125 = vmul.f32 %v926, %v1102
        %v1126 = vmul.f32 %v971, %v1102
        %vm1151 = vcmask 1045504
        %v1152 = vrot.slane %v1103, 2
        %v1153 = vrot.slane %v1104, 2
        %v1154 = vsel %vm1151, %v1152, %v1153
        %v1155 = vrot.slane %v1105, 2
        %v1156 = vsel %vm1151, %v1153, %v1155
        %v1157 = vrot.slane %v1106, 2
        %v1158 = vrot.slane %v1107, 2
        %v1159 = vsel %vm1151, %v1157, %v1158
        %v1160 = vrot.slane %v1108, 2
        %v1161 = vsel %vm1151, %v1158, %v1160
        %v1162 = vrot.slane %v1109, 2
        %v1163 = vrot.slane %v1110, 2
        %v1164 = vsel %vm1151, %v1162, %v1163
        %v1165 = vrot.slane %v1111, 2
        %v1166 = vsel %vm1151, %v1163, %v1165
        %v1167 = vrot.slane %v1112, 2
        %v1168 = vrot.slane %v1113, 2
        %v1169 = vsel %vm1151, %v1167, %v1168
        %v1170 = vrot.slane %v1114, 2
        %v1171 = vsel %vm1151, %v1168, %v1170
        %v1172 = vrot.slane %v1115, 2
        %v1173 = vrot.slane %v1116, 2
        %v1174 = vsel %vm1151, %v1172, %v1173
        %v1175 = vrot.slane %v1117, 2
        %v1176 = vsel %vm1151, %v1173, %v1175
        %v1177 = vrot.slane %v1118, 2
        %v1178 = vrot.slane %v1119, 2
        %v1179 = vsel %vm1151, %v1177, %v1178
        %v1180 = vrot.slane %v1120, 2
        %v1181 = vsel %vm1151, %v1178, %v1180
        %v1182 = vrot.slane %v1121, 2
        %v1183 = vrot.slane %v1122, 2
        %v1184 = vsel %vm1151, %v1182, %v1183
        %v1185 = vrot.slane %v1123, 2
        %v1186 = vsel %vm1151, %v1183, %v1185
        %v1187 = vrot.slane %v1124, 2
        %v1188 = vrot.slane %v1125, 2
        %v1189 = vsel %vm1151, %v1187, %v1188
        %v1190 = vrot.slane %v1126, 2
        %v1191 = vsel %vm1151, %v1188, %v1190
        %v1208 = vadd.f32 %v1082, %v1154
        %v1209 = vadd.f32 %v1083, %v1156
        %v1210 = vadd.f32 %v1084, %v1159
        %v1211 = vadd.f32 %v1085, %v1161
        %v1212 = vadd.f32 %v1086, %v1164
        %v1213 = vadd.f32 %v1087, %v1166
        %v1214 = vadd.f32 %v1088, %v1169
        %v1215 = vadd.f32 %v1089, %v1171
        %v1216 = vadd.f32 %v1090, %v1174
        %v1217 = vadd.f32 %v1091, %v1176
        %v1218 = vadd.f32 %v1092, %v1179
        %v1219 = vadd.f32 %v1093, %v1181
        %v1220 = vadd.f32 %v1094, %v1184
        %v1221 = vadd.f32 %v1095, %v1186
        %v1222 = vadd.f32 %v1096, %v1189
        %v1223 = vadd.f32 %v1097, %v1191
        %s1224 = scalar_lea.vmem [#allocation2], 12
        %v1225 = vld [vmem:[%s1224] sm:$0xf]
        %v1226 = vld [vmem:[%s1224 + $0x4] sm:$0xf]
        %v1227 = vld [vmem:[%s1224 + $0x8] sm:$0xf]
        %v1228 = vld [vmem:[%s1224 + $0xc] sm:$0xf]
        %v1229 = vld [vmem:[%s1224 + $0x10] sm:$0xf]
        %v1230 = vld [vmem:[%s1224 + $0x14] sm:$0xf]
        %v1231 = vld [vmem:[%s1224 + $0x18] sm:$0xf]
        %v1232 = vld [vmem:[%s1224 + $0x1c] sm:$0xf]
        %v1233 = vld [vmem:[%s1224 + $0x20] sm:$0xf]
        %v1234 = vld [vmem:[%s1224 + $0x24] sm:$0xf]
        %v1235 = vld [vmem:[%s1224 + $0x28] sm:$0xf]
        %v1236 = vld [vmem:[%s1224 + $0x2c] sm:$0xf]
        %v1237 = vld [vmem:[%s1224 + $0x30] sm:$0xf]
        %v1238 = vld [vmem:[%s1224 + $0x34] sm:$0xf]
        %v1239 = vld [vmem:[%s1224 + $0x38] sm:$0xf]
        %v1240 = vld [vmem:[%s1224 + $0x3c] sm:$0xf]
        %v1241 = vld [vmem:[%s1224 + $0x40] sm:$0xf]
        %v1242 = vld [vmem:[%s1224 + $0x44] sm:$0xf]
        %v1243 = vld [vmem:[%s1224 + $0x48] sm:$0xf]
        %v1244 = vld [vmem:[%s1224 + $0x4c] sm:$0xf]
        %v1245 = vld [vmem:[%s1224 + $0x50] sm:$0xf]
        %v1246 = vld [vmem:[%s1224 + $0x54] sm:$0xf]
        %v1247 = vld [vmem:[%s1224 + $0x58] sm:$0xf]
        %v1248 = vld [vmem:[%s1224 + $0x5c] sm:$0xf]
        %v1249 = vunpack.c.l.bf16 %v1225
        %v1250 = vunpack.c.l.bf16 %v1226
        %v1251 = vunpack.c.l.bf16 %v1228
        %v1252 = vunpack.c.l.bf16 %v1229
        %v1253 = vunpack.c.l.bf16 %v1231
        %v1254 = vunpack.c.l.bf16 %v1232
        %v1255 = vunpack.c.l.bf16 %v1234
        %v1256 = vunpack.c.l.bf16 %v1235
        %v1257 = vunpack.c.l.bf16 %v1237
        %v1258 = vunpack.c.l.bf16 %v1238
        %v1259 = vunpack.c.l.bf16 %v1240
        %v1260 = vunpack.c.l.bf16 %v1241
        %v1261 = vunpack.c.l.bf16 %v1243
        %v1262 = vunpack.c.l.bf16 %v1244
        %v1263 = vunpack.c.l.bf16 %v1246
        %v1264 = vunpack.c.l.bf16 %v1247
        %v1265 = vld [vmem:[#allocation8 + $0x3] sm:$0x1]
        %v1266 = vlaneseq
        %v1267 = vshrl.u32 %v1266, 7
        %v1268 = vsub.s32 0, %v1267
        %v1269 = vrot.slane %v1265, %v1268
        %v1270 = vmul.f32 %v1249, %v1269
        %v1271 = vmul.f32 %v1250, %v1269
        %v1272 = vmul.f32 %v1251, %v1269
        %v1273 = vmul.f32 %v1252, %v1269
        %v1274 = vmul.f32 %v1253, %v1269
        %v1275 = vmul.f32 %v1254, %v1269
        %v1276 = vmul.f32 %v1255, %v1269
        %v1277 = vmul.f32 %v1256, %v1269
        %v1278 = vmul.f32 %v1257, %v1269
        %v1279 = vmul.f32 %v1258, %v1269
        %v1280 = vmul.f32 %v1259, %v1269
        %v1281 = vmul.f32 %v1260, %v1269
        %v1282 = vmul.f32 %v1261, %v1269
        %v1283 = vmul.f32 %v1262, %v1269
        %v1284 = vmul.f32 %v1263, %v1269
        %v1285 = vmul.f32 %v1264, %v1269
        %v1286 = vadd.f32 %v1208, %v1270
        %v1287 = vadd.f32 %v1209, %v1271
        %v1288 = vadd.f32 %v1210, %v1272
        %v1289 = vadd.f32 %v1211, %v1273
        %v1290 = vadd.f32 %v1212, %v1274
        %v1291 = vadd.f32 %v1213, %v1275
        %v1292 = vadd.f32 %v1214, %v1276
        %v1293 = vadd.f32 %v1215, %v1277
        %v1294 = vadd.f32 %v1216, %v1278
        %v1295 = vadd.f32 %v1217, %v1279
        %v1296 = vadd.f32 %v1218, %v1280
        %v1297 = vadd.f32 %v1219, %v1281
        %v1298 = vadd.f32 %v1220, %v1282
        %v1299 = vadd.f32 %v1221, %v1283
        %v1300 = vadd.f32 %v1222, %v1284
        %v1301 = vadd.f32 %v1223, %v1285
        %v1302 = vunpack.c.l.bf16 %v1227
        %v1303 = vunpack.c.l.bf16 %v1230
        %v1304 = vunpack.c.l.bf16 %v1233
        %v1305 = vunpack.c.l.bf16 %v1236
        %v1306 = vunpack.c.l.bf16 %v1239
        %v1307 = vunpack.c.l.bf16 %v1242
        %v1308 = vunpack.c.l.bf16 %v1245
        %v1309 = vunpack.c.l.bf16 %v1248
        %v1310 = vld [vmem:[#allocation8 + $0x4] sm:$0x1]
        %v1311 = vlaneseq
        %v1312 = vshrl.u32 %v1311, 7
        %v1313 = vsub.s32 0, %v1312
        %v1314 = vrot.slane %v1310, %v1313
        %v1315 = vmul.f32 %v1249, %v1314
        %v1316 = vmul.f32 %v1250, %v1314
        %v1317 = vmul.f32 %v1302, %v1314
        %v1318 = vmul.f32 %v1251, %v1314
        %v1319 = vmul.f32 %v1252, %v1314
        %v1320 = vmul.f32 %v1303, %v1314
        %v1321 = vmul.f32 %v1253, %v1314
        %v1322 = vmul.f32 %v1254, %v1314
        %v1323 = vmul.f32 %v1304, %v1314
        %v1324 = vmul.f32 %v1255, %v1314
        %v1325 = vmul.f32 %v1256, %v1314
        %v1326 = vmul.f32 %v1305, %v1314
        %v1327 = vmul.f32 %v1257, %v1314
        %v1328 = vmul.f32 %v1258, %v1314
        %v1329 = vmul.f32 %v1306, %v1314
        %v1330 = vmul.f32 %v1259, %v1314
        %v1331 = vmul.f32 %v1260, %v1314
        %v1332 = vmul.f32 %v1307, %v1314
        %v1333 = vmul.f32 %v1261, %v1314
        %v1334 = vmul.f32 %v1262, %v1314
        %v1335 = vmul.f32 %v1308, %v1314
        %v1336 = vmul.f32 %v1263, %v1314
        %v1337 = vmul.f32 %v1264, %v1314
        %v1338 = vmul.f32 %v1309, %v1314
        %v1363 = vrot.slane %v1315, 1
        %v1364 = vrot.slane %v1316, 1
        %v1365 = vsel %vm1025, %v1363, %v1364
        %v1366 = vrot.slane %v1317, 1
        %v1367 = vsel %vm1025, %v1364, %v1366
        %v1368 = vrot.slane %v1318, 1
        %v1369 = vrot.slane %v1319, 1
        %v1370 = vsel %vm1025, %v1368, %v1369
        %v1371 = vrot.slane %v1320, 1
        %v1372 = vsel %vm1025, %v1369, %v1371
        %v1373 = vrot.slane %v1321, 1
        %v1374 = vrot.slane %v1322, 1
        %v1375 = vsel %vm1025, %v1373, %v1374
        %v1376 = vrot.slane %v1323, 1
        %v1377 = vsel %vm1025, %v1374, %v1376
        %v1378 = vrot.slane %v1324, 1
        %v1379 = vrot.slane %v1325, 1
        %v1380 = vsel %vm1025, %v1378, %v1379
        %v1381 = vrot.slane %v1326, 1
        %v1382 = vsel %vm1025, %v1379, %v1381
        %v1383 = vrot.slane %v1327, 1
        %v1384 = vrot.slane %v1328, 1
        %v1385 = vsel %vm1025, %v1383, %v1384
        %v1386 = vrot.slane %v1329, 1
        %v1387 = vsel %vm1025, %v1384, %v1386
        %v1388 = vrot.slane %v1330, 1
        %v1389 = vrot.slane %v1331, 1
        %v1390 = vsel %vm1025, %v1388, %v1389
        %v1391 = vrot.slane %v1332, 1
        %v1392 = vsel %vm1025, %v1389, %v1391
        %v1393 = vrot.slane %v1333, 1
        %v1394 = vrot.slane %v1334, 1
        %v1395 = vsel %vm1025, %v1393, %v1394
        %v1396 = vrot.slane %v1335, 1
        %v1397 = vsel %vm1025, %v1394, %v1396
        %v1398 = vrot.slane %v1336, 1
        %v1399 = vrot.slane %v1337, 1
        %v1400 = vsel %vm1025, %v1398, %v1399
        %v1401 = vrot.slane %v1338, 1
        %v1402 = vsel %vm1025, %v1399, %v1401
        %v1419 = vadd.f32 %v1286, %v1365
        %v1420 = vadd.f32 %v1287, %v1367
        %v1421 = vadd.f32 %v1288, %v1370
        %v1422 = vadd.f32 %v1289, %v1372
        %v1423 = vadd.f32 %v1290, %v1375
        %v1424 = vadd.f32 %v1291, %v1377
        %v1425 = vadd.f32 %v1292, %v1380
        %v1426 = vadd.f32 %v1293, %v1382
        %v1427 = vadd.f32 %v1294, %v1385
        %v1428 = vadd.f32 %v1295, %v1387
        %v1429 = vadd.f32 %v1296, %v1390
        %v1430 = vadd.f32 %v1297, %v1392
        %v1431 = vadd.f32 %v1298, %v1395
        %v1432 = vadd.f32 %v1299, %v1397
        %v1433 = vadd.f32 %v1300, %v1400
        %v1434 = vadd.f32 %v1301, %v1402
        %v1435 = vld [vmem:[#allocation8 + $0x5] sm:$0x1]
        %v1436 = vlaneseq
        %v1437 = vshrl.u32 %v1436, 7
        %v1438 = vsub.s32 0, %v1437
        %v1439 = vrot.slane %v1435, %v1438
        %v1440 = vmul.f32 %v1249, %v1439
        %v1441 = vmul.f32 %v1250, %v1439
        %v1442 = vmul.f32 %v1302, %v1439
        %v1443 = vmul.f32 %v1251, %v1439
        %v1444 = vmul.f32 %v1252, %v1439
        %v1445 = vmul.f32 %v1303, %v1439
        %v1446 = vmul.f32 %v1253, %v1439
        %v1447 = vmul.f32 %v1254, %v1439
        %v1448 = vmul.f32 %v1304, %v1439
        %v1449 = vmul.f32 %v1255, %v1439
        %v1450 = vmul.f32 %v1256, %v1439
        %v1451 = vmul.f32 %v1305, %v1439
        %v1452 = vmul.f32 %v1257, %v1439
        %v1453 = vmul.f32 %v1258, %v1439
        %v1454 = vmul.f32 %v1306, %v1439
        %v1455 = vmul.f32 %v1259, %v1439
        %v1456 = vmul.f32 %v1260, %v1439
        %v1457 = vmul.f32 %v1307, %v1439
        %v1458 = vmul.f32 %v1261, %v1439
        %v1459 = vmul.f32 %v1262, %v1439
        %v1460 = vmul.f32 %v1308, %v1439
        %v1461 = vmul.f32 %v1263, %v1439
        %v1462 = vmul.f32 %v1264, %v1439
        %v1463 = vmul.f32 %v1309, %v1439
        %v1488 = vrot.slane %v1440, 2
        %v1489 = vrot.slane %v1441, 2
        %v1490 = vsel %vm1151, %v1488, %v1489
        %v1491 = vrot.slane %v1442, 2
        %v1492 = vsel %vm1151, %v1489, %v1491
        %v1493 = vrot.slane %v1443, 2
        %v1494 = vrot.slane %v1444, 2
        %v1495 = vsel %vm1151, %v1493, %v1494
        %v1496 = vrot.slane %v1445, 2
        %v1497 = vsel %vm1151, %v1494, %v1496
        %v1498 = vrot.slane %v1446, 2
        %v1499 = vrot.slane %v1447, 2
        %v1500 = vsel %vm1151, %v1498, %v1499
        %v1501 = vrot.slane %v1448, 2
        %v1502 = vsel %vm1151, %v1499, %v1501
        %v1503 = vrot.slane %v1449, 2
        %v1504 = vrot.slane %v1450, 2
        %v1505 = vsel %vm1151, %v1503, %v1504
        %v1506 = vrot.slane %v1451, 2
        %v1507 = vsel %vm1151, %v1504, %v1506
        %v1508 = vrot.slane %v1452, 2
        %v1509 = vrot.slane %v1453, 2
        %v1510 = vsel %vm1151, %v1508, %v1509
        %v1511 = vrot.slane %v1454, 2
        %v1512 = vsel %vm1151, %v1509, %v1511
        %v1513 = vrot.slane %v1455, 2
        %v1514 = vrot.slane %v1456, 2
        %v1515 = vsel %vm1151, %v1513, %v1514
        %v1516 = vrot.slane %v1457, 2
        %v1517 = vsel %vm1151, %v1514, %v1516
        %v1518 = vrot.slane %v1458, 2
        %v1519 = vrot.slane %v1459, 2
        %v1520 = vsel %vm1151, %v1518, %v1519
        %v1521 = vrot.slane %v1460, 2
        %v1522 = vsel %vm1151, %v1519, %v1521
        %v1523 = vrot.slane %v1461, 2
        %v1524 = vrot.slane %v1462, 2
        %v1525 = vsel %vm1151, %v1523, %v1524
        %v1526 = vrot.slane %v1463, 2
        %v1527 = vsel %vm1151, %v1524, %v1526
        %v1544 = vadd.f32 %v1419, %v1490
        %v1545 = vadd.f32 %v1420, %v1492
        %v1546 = vadd.f32 %v1421, %v1495
        %v1547 = vadd.f32 %v1422, %v1497
        %v1548 = vadd.f32 %v1423, %v1500
        %v1549 = vadd.f32 %v1424, %v1502
        %v1550 = vadd.f32 %v1425, %v1505
        %v1551 = vadd.f32 %v1426, %v1507
        %v1552 = vadd.f32 %v1427, %v1510
        %v1553 = vadd.f32 %v1428, %v1512
        %v1554 = vadd.f32 %v1429, %v1515
        %v1555 = vadd.f32 %v1430, %v1517
        %v1556 = vadd.f32 %v1431, %v1520
        %v1557 = vadd.f32 %v1432, %v1522
        %v1558 = vadd.f32 %v1433, %v1525
        %v1559 = vadd.f32 %v1434, %v1527
        %s1560 = scalar_lea.vmem [#allocation2], 24
        %v1561 = vld [vmem:[%s1560] sm:$0xf]
        %v1562 = vld [vmem:[%s1560 + $0x4] sm:$0xf]
        %v1563 = vld [vmem:[%s1560 + $0x8] sm:$0xf]
        %v1564 = vld [vmem:[%s1560 + $0xc] sm:$0xf]
        %v1565 = vld [vmem:[%s1560 + $0x10] sm:$0xf]
        %v1566 = vld [vmem:[%s1560 + $0x14] sm:$0xf]
        %v1567 = vld [vmem:[%s1560 + $0x18] sm:$0xf]
        %v1568 = vld [vmem:[%s1560 + $0x1c] sm:$0xf]
        %v1569 = vld [vmem:[%s1560 + $0x20] sm:$0xf]
        %v1570 = vld [vmem:[%s1560 + $0x24] sm:$0xf]
        %v1571 = vld [vmem:[%s1560 + $0x28] sm:$0xf]
        %v1572 = vld [vmem:[%s1560 + $0x2c] sm:$0xf]
        %v1573 = vld [vmem:[%s1560 + $0x30] sm:$0xf]
        %v1574 = vld [vmem:[%s1560 + $0x34] sm:$0xf]
        %v1575 = vld [vmem:[%s1560 + $0x38] sm:$0xf]
        %v1576 = vld [vmem:[%s1560 + $0x3c] sm:$0xf]
        %v1577 = vld [vmem:[%s1560 + $0x40] sm:$0xf]
        %v1578 = vld [vmem:[%s1560 + $0x44] sm:$0xf]
        %v1579 = vld [vmem:[%s1560 + $0x48] sm:$0xf]
        %v1580 = vld [vmem:[%s1560 + $0x4c] sm:$0xf]
        %v1581 = vld [vmem:[%s1560 + $0x50] sm:$0xf]
        %v1582 = vld [vmem:[%s1560 + $0x54] sm:$0xf]
        %v1583 = vld [vmem:[%s1560 + $0x58] sm:$0xf]
        %v1584 = vld [vmem:[%s1560 + $0x5c] sm:$0xf]
        %v1585 = vunpack.c.l.bf16 %v1561
        %v1586 = vunpack.c.l.bf16 %v1562
        %v1587 = vunpack.c.l.bf16 %v1564
        %v1588 = vunpack.c.l.bf16 %v1565
        %v1589 = vunpack.c.l.bf16 %v1567
        %v1590 = vunpack.c.l.bf16 %v1568
        %v1591 = vunpack.c.l.bf16 %v1570
        %v1592 = vunpack.c.l.bf16 %v1571
        %v1593 = vunpack.c.l.bf16 %v1573
        %v1594 = vunpack.c.l.bf16 %v1574
        %v1595 = vunpack.c.l.bf16 %v1576
        %v1596 = vunpack.c.l.bf16 %v1577
        %v1597 = vunpack.c.l.bf16 %v1579
        %v1598 = vunpack.c.l.bf16 %v1580
        %v1599 = vunpack.c.l.bf16 %v1582
        %v1600 = vunpack.c.l.bf16 %v1583
        %v1601 = vld [vmem:[#allocation8 + $0x6] sm:$0x1]
        %v1602 = vlaneseq
        %v1603 = vshrl.u32 %v1602, 7
        %v1604 = vsub.s32 0, %v1603
        %v1605 = vrot.slane %v1601, %v1604
        %v1606 = vmul.f32 %v1585, %v1605
        %v1607 = vmul.f32 %v1586, %v1605
        %v1608 = vmul.f32 %v1587, %v1605
        %v1609 = vmul.f32 %v1588, %v1605
        %v1610 = vmul.f32 %v1589, %v1605
        %v1611 = vmul.f32 %v1590, %v1605
        %v1612 = vmul.f32 %v1591, %v1605
        %v1613 = vmul.f32 %v1592, %v1605
        %v1614 = vmul.f32 %v1593, %v1605
        %v1615 = vmul.f32 %v1594, %v1605
        %v1616 = vmul.f32 %v1595, %v1605
        %v1617 = vmul.f32 %v1596, %v1605
        %v1618 = vmul.f32 %v1597, %v1605
        %v1619 = vmul.f32 %v1598, %v1605
        %v1620 = vmul.f32 %v1599, %v1605
        %v1621 = vmul.f32 %v1600, %v1605
        %v1622 = vadd.f32 %v1544, %v1606
        %v1623 = vadd.f32 %v1545, %v1607
        %v1624 = vadd.f32 %v1546, %v1608
        %v1625 = vadd.f32 %v1547, %v1609
        %v1626 = vadd.f32 %v1548, %v1610
        %v1627 = vadd.f32 %v1549, %v1611
        %v1628 = vadd.f32 %v1550, %v1612
        %v1629 = vadd.f32 %v1551, %v1613
        %v1630 = vadd.f32 %v1552, %v1614
        %v1631 = vadd.f32 %v1553, %v1615
        %v1632 = vadd.f32 %v1554, %v1616
        %v1633 = vadd.f32 %v1555, %v1617
        %v1634 = vadd.f32 %v1556, %v1618
        %v1635 = vadd.f32 %v1557, %v1619
        %v1636 = vadd.f32 %v1558, %v1620
        %v1637 = vadd.f32 %v1559, %v1621
        %v1638 = vunpack.c.l.bf16 %v1563
        %v1639 = vunpack.c.l.bf16 %v1566
        %v1640 = vunpack.c.l.bf16 %v1569
        %v1641 = vunpack.c.l.bf16 %v1572
        %v1642 = vunpack.c.l.bf16 %v1575
        %v1643 = vunpack.c.l.bf16 %v1578
        %v1644 = vunpack.c.l.bf16 %v1581
        %v1645 = vunpack.c.l.bf16 %v1584
        %v1646 = vld [vmem:[#allocation8 + $0x7] sm:$0x1]
        %v1647 = vlaneseq
        %v1648 = vshrl.u32 %v1647, 7
        %v1649 = vsub.s32 0, %v1648
        %v1650 = vrot.slane %v1646, %v1649
        %v1651 = vmul.f32 %v1585, %v1650
        %v1652 = vmul.f32 %v1586, %v1650
        %v1653 = vmul.f32 %v1638, %v1650
        %v1654 = vmul.f32 %v1587, %v1650
        %v1655 = vmul.f32 %v1588, %v1650
        %v1656 = vmul.f32 %v1639, %v1650
        %v1657 = vmul.f32 %v1589, %v1650
        %v1658 = vmul.f32 %v1590, %v1650
        %v1659 = vmul.f32 %v1640, %v1650
        %v1660 = vmul.f32 %v1591, %v1650
        %v1661 = vmul.f32 %v1592, %v1650
        %v1662 = vmul.f32 %v1641, %v1650
        %v1663 = vmul.f32 %v1593, %v1650
        %v1664 = vmul.f32 %v1594, %v1650
        %v1665 = vmul.f32 %v1642, %v1650
        %v1666 = vmul.f32 %v1595, %v1650
        %v1667 = vmul.f32 %v1596, %v1650
        %v1668 = vmul.f32 %v1643, %v1650
        %v1669 = vmul.f32 %v1597, %v1650
        %v1670 = vmul.f32 %v1598, %v1650
        %v1671 = vmul.f32 %v1644, %v1650
        %v1672 = vmul.f32 %v1599, %v1650
        %v1673 = vmul.f32 %v1600, %v1650
        %v1674 = vmul.f32 %v1645, %v1650
        %v1699 = vrot.slane %v1651, 1
        %v1700 = vrot.slane %v1652, 1
        %v1701 = vsel %vm1025, %v1699, %v1700
        %v1702 = vrot.slane %v1653, 1
        %v1703 = vsel %vm1025, %v1700, %v1702
        %v1704 = vrot.slane %v1654, 1
        %v1705 = vrot.slane %v1655, 1
        %v1706 = vsel %vm1025, %v1704, %v1705
        %v1707 = vrot.slane %v1656, 1
        %v1708 = vsel %vm1025, %v1705, %v1707
        %v1709 = vrot.slane %v1657, 1
        %v1710 = vrot.slane %v1658, 1
        %v1711 = vsel %vm1025, %v1709, %v1710
        %v1712 = vrot.slane %v1659, 1
        %v1713 = vsel %vm1025, %v1710, %v1712
        %v1714 = vrot.slane %v1660, 1
        %v1715 = vrot.slane %v1661, 1
        %v1716 = vsel %vm1025, %v1714, %v1715
        %v1717 = vrot.slane %v1662, 1
        %v1718 = vsel %vm1025, %v1715, %v1717
        %v1719 = vrot.slane %v1663, 1
        %v1720 = vrot.slane %v1664, 1
        %v1721 = vsel %vm1025, %v1719, %v1720
        %v1722 = vrot.slane %v1665, 1
        %v1723 = vsel %vm1025, %v1720, %v1722
        %v1724 = vrot.slane %v1666, 1
        %v1725 = vrot.slane %v1667, 1
        %v1726 = vsel %vm1025, %v1724, %v1725
        %v1727 = vrot.slane %v1668, 1
        %v1728 = vsel %vm1025, %v1725, %v1727
        %v1729 = vrot.slane %v1669, 1
        %v1730 = vrot.slane %v1670, 1
        %v1731 = vsel %vm1025, %v1729, %v1730
        %v1732 = vrot.slane %v1671, 1
        %v1733 = vsel %vm1025, %v1730, %v1732
        %v1734 = vrot.slane %v1672, 1
        %v1735 = vrot.slane %v1673, 1
        %v1736 = vsel %vm1025, %v1734, %v1735
        %v1737 = vrot.slane %v1674, 1
        %v1738 = vsel %vm1025, %v1735, %v1737
        %v1755 = vadd.f32 %v1622, %v1701
        %v1756 = vadd.f32 %v1623, %v1703
        %v1757 = vadd.f32 %v1624, %v1706
        %v1758 = vadd.f32 %v1625, %v1708
        %v1759 = vadd.f32 %v1626, %v1711
        %v1760 = vadd.f32 %v1627, %v1713
        %v1761 = vadd.f32 %v1628, %v1716
        %v1762 = vadd.f32 %v1629, %v1718
        %v1763 = vadd.f32 %v1630, %v1721
        %v1764 = vadd.f32 %v1631, %v1723
        %v1765 = vadd.f32 %v1632, %v1726
        %v1766 = vadd.f32 %v1633, %v1728
        %v1767 = vadd.f32 %v1634, %v1731
        %v1768 = vadd.f32 %v1635, %v1733
        %v1769 = vadd.f32 %v1636, %v1736
        %v1770 = vadd.f32 %v1637, %v1738
        %v1771 = vld [vmem:[#allocation8 + $0x8] sm:$0x1]
        %v1772 = vlaneseq
        %v1773 = vshrl.u32 %v1772, 7
        %v1774 = vsub.s32 0, %v1773
        %v1775 = vrot.slane %v1771, %v1774
        %v1776 = vmul.f32 %v1585, %v1775
        %v1777 = vmul.f32 %v1586, %v1775
        %v1778 = vmul.f32 %v1638, %v1775
        %v1779 = vmul.f32 %v1587, %v1775
        %v1780 = vmul.f32 %v1588, %v1775
        %v1781 = vmul.f32 %v1639, %v1775
        %v1782 = vmul.f32 %v1589, %v1775
        %v1783 = vmul.f32 %v1590, %v1775
        %v1784 = vmul.f32 %v1640, %v1775
        %v1785 = vmul.f32 %v1591, %v1775
        %v1786 = vmul.f32 %v1592, %v1775
        %v1787 = vmul.f32 %v1641, %v1775
        %v1788 = vmul.f32 %v1593, %v1775
        %v1789 = vmul.f32 %v1594, %v1775
        %v1790 = vmul.f32 %v1642, %v1775
        %v1791 = vmul.f32 %v1595, %v1775
        %v1792 = vmul.f32 %v1596, %v1775
        %v1793 = vmul.f32 %v1643, %v1775
        %v1794 = vmul.f32 %v1597, %v1775
        %v1795 = vmul.f32 %v1598, %v1775
        %v1796 = vmul.f32 %v1644, %v1775
        %v1797 = vmul.f32 %v1599, %v1775
        %v1798 = vmul.f32 %v1600, %v1775
        %v1799 = vmul.f32 %v1645, %v1775
        %v1824 = vrot.slane %v1776, 2
        %v1825 = vrot.slane %v1777, 2
        %v1826 = vsel %vm1151, %v1824, %v1825
        %v1827 = vrot.slane %v1778, 2
        %v1828 = vsel %vm1151, %v1825, %v1827
        %v1829 = vrot.slane %v1779, 2
        %v1830 = vrot.slane %v1780, 2
        %v1831 = vsel %vm1151, %v1829, %v1830
        %v1832 = vrot.slane %v1781, 2
        %v1833 = vsel %vm1151, %v1830, %v1832
        %v1834 = vrot.slane %v1782, 2
        %v1835 = vrot.slane %v1783, 2
        %v1836 = vsel %vm1151, %v1834, %v1835
        %v1837 = vrot.slane %v1784, 2
        %v1838 = vsel %vm1151, %v1835, %v1837
        %v1839 = vrot.slane %v1785, 2
        %v1840 = vrot.slane %v1786, 2
        %v1841 = vsel %vm1151, %v1839, %v1840
        %v1842 = vrot.slane %v1787, 2
        %v1843 = vsel %vm1151, %v1840, %v1842
        %v1844 = vrot.slane %v1788, 2
        %v1845 = vrot.slane %v1789, 2
        %v1846 = vsel %vm1151, %v1844, %v1845
        %v1847 = vrot.slane %v1790, 2
        %v1848 = vsel %vm1151, %v1845, %v1847
        %v1849 = vrot.slane %v1791, 2
        %v1850 = vrot.slane %v1792, 2
        %v1851 = vsel %vm1151, %v1849, %v1850
        %v1852 = vrot.slane %v1793, 2
        %v1853 = vsel %vm1151, %v1850, %v1852
        %v1854 = vrot.slane %v1794, 2
        %v1855 = vrot.slane %v1795, 2
        %v1856 = vsel %vm1151, %v1854, %v1855
        %v1857 = vrot.slane %v1796, 2
        %v1858 = vsel %vm1151, %v1855, %v1857
        %v1859 = vrot.slane %v1797, 2
        %v1860 = vrot.slane %v1798, 2
        %v1861 = vsel %vm1151, %v1859, %v1860
        %v1862 = vrot.slane %v1799, 2
        %v1863 = vsel %vm1151, %v1860, %v1862
        %v1880 = vadd.f32 %v1755, %v1826
        %v1881 = vadd.f32 %v1756, %v1828
        %v1882 = vadd.f32 %v1757, %v1831
        %v1883 = vadd.f32 %v1758, %v1833
        %v1884 = vadd.f32 %v1759, %v1836
        %v1885 = vadd.f32 %v1760, %v1838
        %v1886 = vadd.f32 %v1761, %v1841
        %v1887 = vadd.f32 %v1762, %v1843
        %v1888 = vadd.f32 %v1763, %v1846
        %v1889 = vadd.f32 %v1764, %v1848
        %v1890 = vadd.f32 %v1765, %v1851
        %v1891 = vadd.f32 %v1766, %v1853
        %v1892 = vadd.f32 %v1767, %v1856
        %v1893 = vadd.f32 %v1768, %v1858
        %v1894 = vadd.f32 %v1769, %v1861
        %v1895 = vadd.f32 %v1770, %v1863
        %v1896 = vld [vmem:[#allocation9] sm:$0x1]
        %v1898 = vlaneseq
        %v1899 = vshrl.u32 %v1898, 7
        %v1900 = vsub.s32 0, %v1899
        %v1901 = vrot.slane %v1896, %v1900
        %v1903 = vadd.f32 %v1880, %v1901
        %v1904 = vadd.f32 %v1881, %v1901
        %v1905 = vadd.f32 %v1882, %v1901
        %v1906 = vadd.f32 %v1883, %v1901
        %v1907 = vadd.f32 %v1884, %v1901
        %v1908 = vadd.f32 %v1885, %v1901
        %v1909 = vadd.f32 %v1886, %v1901
        %v1910 = vadd.f32 %v1887, %v1901
        %v1911 = vadd.f32 %v1888, %v1901
        %v1912 = vadd.f32 %v1889, %v1901
        %v1913 = vadd.f32 %v1890, %v1901
        %v1914 = vadd.f32 %v1891, %v1901
        %v1915 = vadd.f32 %v1892, %v1901
        %v1916 = vadd.f32 %v1893, %v1901
        %v1917 = vadd.f32 %v1894, %v1901
        %v1918 = vadd.f32 %v1895, %v1901
        %v1919 = vmax.f32 %v1903, 0.0
        %v1920 = vmax.f32 %v1904, 0.0
        %v1921 = vmax.f32 %v1905, 0.0
        %v1922 = vmax.f32 %v1906, 0.0
        %v1923 = vmax.f32 %v1907, 0.0
        %v1924 = vmax.f32 %v1908, 0.0
        %v1925 = vmax.f32 %v1909, 0.0
        %v1926 = vmax.f32 %v1910, 0.0
        %v1927 = vmax.f32 %v1911, 0.0
        %v1928 = vmax.f32 %v1912, 0.0
        %v1929 = vmax.f32 %v1913, 0.0
        %v1930 = vmax.f32 %v1914, 0.0
        %v1931 = vmax.f32 %v1915, 0.0
        %v1932 = vmax.f32 %v1916, 0.0
        %v1933 = vmax.f32 %v1917, 0.0
        %v1934 = vmax.f32 %v1918, 0.0
        %v1935 = vmin.f32 %v1919, 6.0
        %v1936 = vmin.f32 %v1920, 6.0
        %v1937 = vmin.f32 %v1921, 6.0
        %v1938 = vmin.f32 %v1922, 6.0
        %v1939 = vmin.f32 %v1923, 6.0
        %v1940 = vmin.f32 %v1924, 6.0
        %v1941 = vmin.f32 %v1925, 6.0
        %v1942 = vmin.f32 %v1926, 6.0
        %v1943 = vmin.f32 %v1927, 6.0
        %v1944 = vmin.f32 %v1928, 6.0
        %v1945 = vmin.f32 %v1929, 6.0
        %v1946 = vmin.f32 %v1930, 6.0
        %v1947 = vmin.f32 %v1931, 6.0
        %v1948 = vmin.f32 %v1932, 6.0
        %v1949 = vmin.f32 %v1933, 6.0
        %v1950 = vmin.f32 %v1934, 6.0
        %v1951 = vpack.c.bf16 %v1936, %v1935
        %v1952 = vpack.c.bf16 %v1938, %v1937
        %v1953 = vpack.c.bf16 %v1940, %v1939
        %v1954 = vpack.c.bf16 %v1942, %v1941
        %v1955 = vpack.c.bf16 %v1944, %v1943
        %v1956 = vpack.c.bf16 %v1946, %v1945
        %v1957 = vpack.c.bf16 %v1948, %v1947
        %v1958 = vpack.c.bf16 %v1950, %v1949
        %v1959 = vld [vmem:[#allocation11] sm:$0xf]
        %v1960 = vld [vmem:[#allocation11 + $0x4] sm:$0xf]
        %v1961 = vld [vmem:[#allocation11 + $0x8] sm:$0xf]
        %v1962 = vld [vmem:[#allocation11 + $0xc] sm:$0xf]
        %v1963 = vld [vmem:[#allocation11 + $0x10] sm:$0xf]
        %v1964 = vld [vmem:[#allocation11 + $0x14] sm:$0xf]
        %v1965 = vld [vmem:[#allocation11 + $0x18] sm:$0xf]
        %v1966 = vld [vmem:[#allocation11 + $0x1c] sm:$0xf]
        %v1967 = vld [vmem:[#allocation11 + $0x20] sm:$0xf]
        %v1968 = vld [vmem:[#allocation11 + $0x24] sm:$0xf]
        %v1969 = vld [vmem:[#allocation11 + $0x28] sm:$0xf]
        %v1970 = vld [vmem:[#allocation11 + $0x2c] sm:$0xf]
        %v1971 = vld [vmem:[#allocation11 + $0x30] sm:$0xf]
        %v1972 = vld [vmem:[#allocation11 + $0x34] sm:$0xf]
        %v1973 = vld [vmem:[#allocation11 + $0x38] sm:$0xf]
        %v1974 = vld [vmem:[#allocation11 + $0x3c] sm:$0xf]
        %v1975 = vld [vmem:[#allocation12] sm:$0x1]
        %v1977 = vlaneseq
        %v1978 = vshrl.u32 %v1977, 7
        %v1979 = vsub.s32 0, %v1978
        %v1980 = vrot.slane %v1975, %v1979
        %v1998 = vunpack.c.l.b16 %v1959
        %v1999 = vunpack.c.l.b16 %v1960
        %v2000 = vunpack.c.l.b16 %v1961
        %v2001 = vunpack.c.l.b16 %v1962
        %v2002 = vunpack.c.l.b16 %v1963
        %v2003 = vunpack.c.l.b16 %v1964
        %v2004 = vunpack.c.l.b16 %v1965
        %v2005 = vunpack.c.l.b16 %v1966
        %v2006 = vunpack.c.l.b16 %v1967
        %v2007 = vunpack.c.l.b16 %v1968
        %v2008 = vunpack.c.l.b16 %v1969
        %v2009 = vunpack.c.l.b16 %v1970
        %v2010 = vunpack.c.l.b16 %v1971
        %v2011 = vunpack.c.l.b16 %v1972
        %v2012 = vunpack.c.l.b16 %v1973
        %v2013 = vunpack.c.l.b16 %v1974
        %v2014 = vpack.c.b16 %v1999, %v1998
        %v2015 = vpack.c.b16 %v2001, %v2000
        %v2016 = vpack.c.b16 %v2003, %v2002
        %v2017 = vpack.c.b16 %v2005, %v2004
        %v2018 = vpack.c.b16 %v2007, %v2006
        %v2019 = vpack.c.b16 %v2009, %v2008
        %v2020 = vpack.c.b16 %v2011, %v2010
        %v2021 = vpack.c.b16 %v2013, %v2012
        %2030 = vmatprep.subr.bf16.mxu0 0
        %2031 = vmatpush1.bf16.msra.mxu0 %v2014
        %2032 = vmatprep.subr.bf16.mxu0 0
        %2033 = vmatpush1.bf16.msra.mxu0 %v2015
        %2034 = vmatprep.subr.bf16.mxu0 0
        %2035 = vmatpush1.bf16.msra.mxu0 %v2016
        %2036 = vmatprep.subr.bf16.mxu0 0
        %2037 = vmatpush1.bf16.msra.mxu0 %v2017
        %2038 = vmatprep.subr.bf16.mxu0 0
        %2039 = vmatpush1.bf16.msra.mxu0 %v2018
        %2040 = vmatprep.subr.bf16.mxu0 0
        %2041 = vmatpush1.bf16.msra.mxu0 %v2019
        %2042 = vmatprep.subr.bf16.mxu0 0
        %2043 = vmatpush1.bf16.msra.mxu0 %v2020
        %2044 = vmatprep.subr.bf16.mxu0 0
        %2045 = vmatpush1.bf16.msra.mxu0 %v2021
        %2046 = vmatprep.subr.bf16.mxu0 0
        %2047 = vmatpush1.bf16.msra.mxu0 0
        %2048 = vmatprep.subr.bf16.mxu0 0
        %2049 = vmatpush1.bf16.msra.mxu0 0
        %2050 = vmatprep.subr.bf16.mxu0 0
        %2051 = vmatpush1.bf16.msra.mxu0 0
        %2052 = vmatprep.subr.bf16.mxu0 0
        %2053 = vmatpush1.bf16.msra.mxu0 0
        %2054 = vmatprep.subr.bf16.mxu0 0
        %2055 = vmatpush1.bf16.msra.mxu0 0
        %2056 = vmatprep.subr.bf16.mxu0 0
        %2057 = vmatpush1.bf16.msra.mxu0 0
        %2058 = vmatprep.subr.bf16.mxu0 0
        %2059 = vmatpush1.bf16.msra.mxu0 0
        %2060 = vmatprep.subr.bf16.mxu0 0
        %2061 = vmatpush1.bf16.msra.mxu0 0
        %2062 = vmatprep.mubr.bf16.mxu0 0
        %2063 = vmatmul.mubr.bf16.gmra.mrb[0].mxu0 %v1951
        %v2064 = vpop.f32.mrb[0].mxu0
        %v2065 = vadd.f32 %v1980, %v2064
        %v2066 = vpop.f32.mrb[0].mxu0
        %v2067 = vpop.f32.mrb[0].mxu0
        %v2068 = vadd.f32 %v1980, %v2067
        %v2069 = vpop.f32.mrb[0].mxu0
        %2070 = vmatprep.mubr.bf16.mxu0 0
        %2071 = vmatmul.mubr.bf16.gmra.mrb[0].mxu0 %v1952
        %v2072 = vpop.f32.mrb[0].mxu0
        %v2073 = vadd.f32 %v1980, %v2072
        %v2074 = vpop.f32.mrb[0].mxu0
        %v2075 = vpop.f32.mrb[0].mxu0
        %v2076 = vadd.f32 %v1980, %v2075
        %v2077 = vpop.f32.mrb[0].mxu0
        %2078 = vmatprep.mubr.bf16.mxu0 0
        %2079 = vmatmul.mubr.bf16.gmra.mrb[0].mxu0 %v1953
        %v2080 = vpop.f32.mrb[0].mxu0
        %v2081 = vadd.f32 %v1980, %v2080
        %v2082 = vpop.f32.mrb[0].mxu0
        %v2083 = vpop.f32.mrb[0].mxu0
        %v2084 = vadd.f32 %v1980, %v2083
        %v2085 = vpop.f32.mrb[0].mxu0
        %2086 = vmatprep.mubr.bf16.mxu0 0
        %2087 = vmatmul.mubr.bf16.gmra.mrb[0].mxu0 %v1954
        %v2088 = vpop.f32.mrb[0].mxu0
        %v2089 = vadd.f32 %v1980, %v2088
        %v2090 = vpop.f32.mrb[0].mxu0
        %v2091 = vpop.f32.mrb[0].mxu0
        %v2092 = vadd.f32 %v1980, %v2091
        %v2093 = vpop.f32.mrb[0].mxu0
        %2094 = vmatprep.mubr.bf16.mxu0 0
        %2095 = vmatmul.mubr.bf16.gmra.mrb[0].mxu0 %v1955
        %v2096 = vpop.f32.mrb[0].mxu0
        %v2097 = vadd.f32 %v1980, %v2096
        %v2098 = vpop.f32.mrb[0].mxu0
        %v2099 = vpop.f32.mrb[0].mxu0
        %v2100 = vadd.f32 %v1980, %v2099
        %v2101 = vpop.f32.mrb[0].mxu0
        %2102 = vmatprep.mubr.bf16.mxu0 0
        %2103 = vmatmul.mubr.bf16.gmra.mrb[0].mxu0 %v1956
        %v2104 = vpop.f32.mrb[0].mxu0
        %v2105 = vadd.f32 %v1980, %v2104
        %v2106 = vpop.f32.mrb[0].mxu0
        %v2107 = vpop.f32.mrb[0].mxu0
        %v2108 = vadd.f32 %v1980, %v2107
        %v2109 = vpop.f32.mrb[0].mxu0
        %2110 = vmatprep.mubr.bf16.mxu0 0
        %2111 = vmatmul.mubr.bf16.gmra.mrb[0].mxu0 %v1957
        %v2112 = vpop.f32.mrb[0].mxu0
        %v2113 = vadd.f32 %v1980, %v2112
        %v2114 = vpop.f32.mrb[0].mxu0
        %v2115 = vpop.f32.mrb[0].mxu0
        %v2116 = vadd.f32 %v1980, %v2115
        %v2117 = vpop.f32.mrb[0].mxu0
        %2118 = vmatprep.mubr.bf16.mxu0 0
        %2119 = vmatmul.mubr.bf16.gmra.mrb[0].mxu0 %v1958
        %v2120 = vpop.f32.mrb[0].mxu0
        %v2121 = vadd.f32 %v1980, %v2120
        %v2122 = vpop.f32.mrb[0].mxu0
        %v2123 = vpop.f32.mrb[0].mxu0
        %v2124 = vadd.f32 %v1980, %v2123
        %v2125 = vpop.f32.mrb[0].mxu0
        %2126 = vdwg.mxu0
        %2127 = vst [vmem:[%s350] sm:$0xff] %v2065
        %2128 = vst [vmem:[%s350 + $0x8] sm:$0xff] %v2068
        %2129 = vst [vmem:[%s350 + $0x10] sm:$0xff] %v2073
        %2130 = vst [vmem:[%s350 + $0x18] sm:$0xff] %v2076
        %2131 = vst [vmem:[%s350 + $0x20] sm:$0xff] %v2081
        %2132 = vst [vmem:[%s350 + $0x28] sm:$0xff] %v2084
        %2133 = vst [vmem:[%s350 + $0x30] sm:$0xff] %v2089
        %2134 = vst [vmem:[%s350 + $0x38] sm:$0xff] %v2092
        %2135 = vst [vmem:[%s350 + $0x40] sm:$0xff] %v2097
        %2136 = vst [vmem:[%s350 + $0x48] sm:$0xff] %v2100
        %2137 = vst [vmem:[%s350 + $0x50] sm:$0xff] %v2105
        %2138 = vst [vmem:[%s350 + $0x58] sm:$0xff] %v2108
        %2139 = vst [vmem:[%s350 + $0x60] sm:$0xff] %v2113
        %2140 = vst [vmem:[%s350 + $0x68] sm:$0xff] %v2116
        %2141 = vst [vmem:[%s350 + $0x70] sm:$0xff] %v2121
        %2142 = vst [vmem:[%s350 + $0x78] sm:$0xff] %v2124
        %s2143 = sand.u32 %s179, 1
        %s2144 = scalar_lea.sflag [#allocation5], %s2143
        %s2145 = sand.u32 %s179, 1
        %s2146 = smul.addr %s2145, 128
        %s2147 = scalar_lea.vmem [#allocation14], %s2146
        // Predicated region
        $region69: #{linear_bottleneck.1} parent=43 // pred_check
          %p2148 = pneg %p189
        $region70: #{linear_bottleneck.1} parent=43 // pred_check_branch
          %2150 = sbr.rel (%p2148) target = $region72
        $region71: #{linear_bottleneck.1} parent=43 // pred_region
          %s2151 = smul.u32 16, %s31
          %s2153 = ssub.s32 2048, 2048
          %2154 = vsyncadd %s2144, %s2153
          %s2155 = smul.addr %s30, 32
          %s2156 = sadd.s32 %s2151, %s2155
          %s2157 = smul.addr %s2156, 128
          %s2158 = scalar_lea.hbm %s6, %s2157
          %s2159 = sshll.u32 %s2147, 4
          %s2160 = int_to_ptr.vmem [resolvable:$true] %s2159
          %2165 = dma.vmem_to_hbm [thread:$0]  %s2160, 2048, %s2158, %s2144, 128, 128, 8
        $region72: #{linear_bottleneck.1} parent=43 // pred_fallthru
          _
      $region44: #{linear_bottleneck.1} parent=5 // pred_fallthru
        _
      %p2166 = scmp.le.s32.totalorder 2, %s21
      // Predicated region
      $region73: #{linear_bottleneck.1} parent=5 // pred_check
        %p2167 = pneg %p2166
      $region74: #{linear_bottleneck.1} parent=5 // pred_check_branch
        %2169 = sbr.rel (%p2167) target = $region76
      $region75: #{linear_bottleneck.1} parent=5 // pred_region
        %s2170 = ssub.s32 %s21, 2
        // Predicated region
        $region77: #{linear_bottleneck.1} parent=75 // pred_check
          %p2171 = pneg %p195
        $region78: #{linear_bottleneck.1} parent=75 // pred_check_branch
          %2173 = sbr.rel (%p2171) target = $region80
        $region79: #{linear_bottleneck.1} parent=75 // pred_region
          %s2174 = sand.u32 %s180, 1
          %s2175 = scalar_lea.sflag [#allocation5], %s2174
          %s2176 = sand.u32 %s180, 1
          %s2177 = smul.addr %s2176, 128
          %s2178 = scalar_lea.vmem [#allocation14], %s2177
          %2179 = dma.done %s2175, 2048
        $region80: #{linear_bottleneck.1} parent=75 // pred_fallthru
          _
      $region76: #{linear_bottleneck.1} parent=5 // pred_fallthru
        _
    $region6: #{linear_bottleneck.1} parent=1 // loop_footer
      %s25 = sadd.s32 1, %s21
    $region7: #{linear_bottleneck.1} parent=1 // loop_footer_branch
      %20 = sbr.rel target = $region3
    $region8: #{linear_bottleneck.1} parent=1 // loop_exit
      _
    %2180 = vsyncpa [#allocation4], 1
    %s2181 = scalar_lea.sflag [#allocation4], 1
    %2182 = vsyncpa %s2181, 1
    %2183 = vsyncpa [#allocation7], 1
    %2184 = vsyncpa [#allocation10], 1
    %2185 = vsyncpa [#allocation13], 1
    %2186 = vsyncpa [#allocation5], 1
    %s2187 = scalar_lea.sflag [#allocation5], 1
    %2188 = vsyncpa %s2187, 1

</llo_original>
